<compile_context>
chip_gen: v6e
topology: v6e:2x2x1
jax: 0.10.0
libtpu: 0.0.40
codegen_flags: <defaults>
</compile_context>

<pallas_src>
import functools
import math

import jax
import jax.numpy as jnp
from jax.experimental import pallas as pl
from jax.experimental.pallas import tpu as pltpu


_VMEM_LIMIT_BYTES = 48 * 1024 * 1024     # fits v7x (64 MiB) and v5e/v6e (128 MiB)
_TARGET_BLOCK_BYTES = 8 * 1024 * 1024    # ~8 MiB z block per pipeline buffer
_CHUNK_TARGET_ROWS = 2048                # pass-1 matmul chunk (h chunk ~1 MiB @ H=128)


def _round_up(x, m):
    return (x + m - 1) // m * m


def _tree_sum(parts):
    while len(parts) > 1:
        nxt = []
        for i in range(0, len(parts), 2):
            if i + 1 < len(parts):
                nxt.append(parts[i] + parts[i + 1])
            else:
                nxt.append(parts[i])
        parts = nxt
    return parts[0]


def _p1_kernel(z_ref, w1_ref, b1_ref, p_ref, *, chunk_rows, group, mm_dtype):
    """Per-tile sums of tanh(z @ W1 + b1), grouped by (local row % group)."""
    tile_rows = z_ref.shape[0]
    hidden = w1_ref.shape[1]
    n_chunks = tile_rows // chunk_rows

    w1v = w1_ref[...]
    b1v = b1_ref[...]
    if mm_dtype is not None:
        w1v = w1v.astype(mm_dtype)

    def chunk_body(c, acc):
        off = pl.multiple_of(c * chunk_rows, chunk_rows)
        x = z_ref[pl.ds(off, chunk_rows), :]
        if mm_dtype is not None:
            x = x.astype(mm_dtype)
        h = jnp.tanh(
            jnp.dot(x, w1v, preferred_element_type=jnp.float32) + b1v)
        # Fold chunk rows into `group` sublane-residue classes (row r of the
        # chunk lands in class r % group).  Slices are vreg-aligned (group is
        # a multiple of 8); tree-sum keeps the VPU add chain short.
        parts = [h[s * group:(s + 1) * group, :]
                 for s in range(chunk_rows // group)]
        return acc + _tree_sum(parts)

    acc = jax.lax.fori_loop(
        0, n_chunks, chunk_body,
        jnp.zeros((group, hidden), jnp.float32))
    p_ref[0] = acc


def _p2_kernel(z_ref, b_ref, o_ref, *, mm_dtype):
    """out = z_packed @ B (banded beta matrix): lane-dense metapath sum."""
    x = z_ref[...]
    b = b_ref[...]
    if mm_dtype is not None:
        x = x.astype(mm_dtype)
        b = b.astype(mm_dtype)
    o_ref[...] = jnp.dot(
        x, b, preferred_element_type=jnp.float32).astype(o_ref.dtype)


def semantic_attention(z, w1, b1, w2, *, matmul_dtype=None):
    """z: (N, M, D); w1: (D, H); b1: (H,); w2: (H,).  Returns (N, D)."""
    N, M, D = z.shape
    H = w1.shape[1]
    node_bytes = M * D * z.dtype.itemsize

    # ---- node packing so the pass-2 output block is a dense 128-lane slab ----
    pack = 1
    if D % 128 != 0:
        for p in (2, 4, 8, 16):
            if (p * D) % 128 == 0:
                pack = p
                break

    # ---- tile / padding choice (shared by both passes) ----
    align = 8 * pack
    target_nodes = max(align, (_TARGET_BLOCK_BYTES // node_bytes) // align * align)
    if N <= target_nodes:
        tile_n = _round_up(N, align)
        num_tiles = 1
    else:
        num_tiles = -(-N // target_nodes)                # ceil
        tile_n = _round_up(-(-N // num_tiles), align)
    n_pad = tile_n * num_tiles
    z_pad = z if n_pad == N else jnp.pad(z, ((0, n_pad - N), (0, 0), (0, 0)))

    # ---- pass 1: per-tile grouped row sums of tanh(z W1 + b1) ----
    group = (M * 8) // math.gcd(M, 8)                    # lcm(M, 8): vreg aligned
    tile_rows = tile_n * M                               # multiple of `group`
    base = tile_rows // group
    div = 1
    for cand in range(min(base, max(1, _CHUNK_TARGET_ROWS // group)), 0, -1):
        if base % cand == 0:
            div = cand
            break
    chunk_rows = div * group

    z_flat = z_pad.reshape(n_pad * M, D)                 # contiguous, free reshape
    b1_2d = b1.reshape(1, H)

    partials = pl.pallas_call(
        functools.partial(_p1_kernel, chunk_rows=chunk_rows, group=group,
                          mm_dtype=matmul_dtype),
        out_shape=jax.ShapeDtypeStruct((num_tiles, group, H), jnp.float32),
        grid_spec=pltpu.PrefetchScalarGridSpec(
            num_scalar_prefetch=0,
            grid=(num_tiles,),
            in_specs=[
                pl.BlockSpec((tile_rows, D), lambda i: (i, 0)),
                pl.BlockSpec((D, H), lambda i: (0, 0)),
                pl.BlockSpec((1, H), lambda i: (0, 0)),
            ],
            out_specs=pl.BlockSpec((1, group, H), lambda i: (i, 0, 0)),
        ),
        compiler_params=pltpu.CompilerParams(
            dimension_semantics=("parallel",),
            vmem_limit_bytes=_VMEM_LIMIT_BYTES,
        ),
    )(z_flat, w1, b1_2d)

    # ---- tiny O(M*H) glue: fold groups -> metapaths, mean, w2, softmax ----
    part = partials.sum(axis=0)                          # (group, H)
    hsum = part.reshape(group // M, M, H).sum(axis=0)    # (M, H)
    if n_pad != N:                                       # padded rows added tanh(b1)
        hsum = hsum - (n_pad - N) * jnp.tanh(b1_2d)
    w = (hsum @ w2) / jnp.float32(N)                     # (M,)
    beta = jax.nn.softmax(w, axis=0)

    # ---- pass 2: out = z_packed @ B2 (banded beta matrix, packed nodes) ----
    eye_d = jnp.eye(D, dtype=jnp.float32)
    band = (beta[:, None, None] * eye_d[None, :, :]).reshape(M * D, D)
    if pack > 1:
        band = jnp.kron(jnp.eye(pack, dtype=jnp.float32), band)
    z2p = z_pad.reshape(n_pad // pack, pack * M * D)     # contiguous, free reshape

    out = pl.pallas_call(
        functools.partial(_p2_kernel, mm_dtype=matmul_dtype),
        out_shape=jax.ShapeDtypeStruct((n_pad // pack, pack * D), z.dtype),
        grid_spec=pltpu.PrefetchScalarGridSpec(
            num_scalar_prefetch=0,
            grid=(num_tiles,),
            in_specs=[
                pl.BlockSpec((tile_n // pack, pack * M * D), lambda i: (i, 0)),
                pl.BlockSpec((pack * M * D, pack * D), lambda i: (0, 0)),
            ],
            out_specs=pl.BlockSpec((tile_n // pack, pack * D), lambda i: (i, 0)),
        ),
        compiler_params=pltpu.CompilerParams(
            dimension_semantics=("parallel",),
            vmem_limit_bytes=_VMEM_LIMIT_BYTES,
        ),
    )(z2p, band)

    return out.reshape(n_pad, D)[:N]


def semantic_attention_ref(z, w1, b1, w2):
    """Pure-JAX reference mirroring the PyTorch module."""
    proj = jnp.tanh(z @ w1 + b1) @ w2                    # (N, M)
    w = proj.mean(axis=0)                                # (M,)
    beta = jax.nn.softmax(w, axis=0)                     # (M,)
    return jnp.einsum("m,nmd->nd", beta, z)


if __name__ == "__main__":
    # Small shapes consistent with the module: N nodes, M metapaths, in_size D, hidden H.
    N, M, D, H = 256, 4, 64, 128

    key = jax.random.PRNGKey(0)
    kz, k1, k2, k3 = jax.random.split(key, 4)

    z = jax.random.normal(kz, (N, M, D), dtype=jnp.float32)
    # nn.Linear(in_size, hidden): weight (H, D), bias (H,).  Stored as W1=(D, H)
    # so y = x @ W1 + b1 == x @ weight.T + bias.
    w1 = jax.random.normal(k1, (D, H), dtype=jnp.float32) * (1.0 / D ** 0.5)
    b1 = jax.random.normal(k2, (H,), dtype=jnp.float32) * 0.02
    # nn.Linear(hidden, 1, bias=False): weight (1, H) -> stored as (H,).
    w2 = jax.random.normal(k3, (H,), dtype=jnp.float32) * (1.0 / H ** 0.5)

    out = jax.block_until_ready(semantic_attention(z, w1, b1, w2))
    ref = semantic_attention_ref(z, w1, b1, w2)

    assert out.shape == (N, D)
    err = float(jnp.max(jnp.abs(out - ref)))
    assert jnp.allclose(out, ref, atol=1e-4, rtol=1e-4), err

    print("KERNEL_OK")
</pallas_src>

<mosaic_0001>
module attributes {stable_mosaic.version = 11 : i64} {
  func.func @_p1_kernel(%arg0: i32, %arg1: memref<1024x64xf32, #tpu.memory_space<vmem>>, %arg2: memref<64x128xf32, #tpu.memory_space<vmem>>, %arg3: memref<1x128xf32, #tpu.memory_space<vmem>>, %arg4: memref<1x8x128xf32, #tpu.memory_space<vmem>>) attributes {dimension_semantics = [#tpu.dimension_semantics<parallel>], iteration_bounds = array<i64: 1>, scalar_prefetch = 0 : i64, scratch_operands = 0 : i64, tpu.core_type = #tpu.core_type<tc>, window_params = [{transform_indices = @transform_0, window_bounds = array<i64: 1024, 64>}, {pipeline_mode = #tpu.pipeline_mode<synchronous>, transform_indices = @transform_1, window_bounds = array<i64: 64, 128>}, {pipeline_mode = #tpu.pipeline_mode<synchronous>, transform_indices = @transform_2, window_bounds = array<i64: 1, 128>}, {transform_indices = @transform_3, window_bounds = array<i64: 1, 8, 128>}]} {
    %c0 = arith.constant 0 : index
    %c0_0 = arith.constant 0 : index
    %0 = vector.load %arg2[%c0, %c0_0] : memref<64x128xf32, #tpu.memory_space<vmem>>, vector<64x128xf32>
    %c0_1 = arith.constant 0 : index
    %c0_2 = arith.constant 0 : index
    %1 = vector.load %arg3[%c0_1, %c0_2] : memref<1x128xf32, #tpu.memory_space<vmem>>, vector<1x128xf32>
    %cst = arith.constant 0.000000e+00 : f32
    %2 = vector.broadcast %cst : f32 to vector<8x128xf32>
    %c0_i32 = arith.constant 0 : i32
    %c1024_i32 = arith.constant 1024 : i32
    %3 = arith.muli %c0_i32, %c1024_i32 : i32
    %4 = tpu.assume_multiple %3, 1024 : i32
    %5 = arith.index_cast %4 : i32 to index
    %c0_3 = arith.constant 0 : index
    %6 = vector.load %arg1[%5, %c0_3] : memref<1024x64xf32, #tpu.memory_space<vmem>>, vector<1024x64xf32>
    %cst_4 = arith.constant dense<0.000000e+00> : vector<1024x128xf32>
    %7 = tpu.matmul %6, %0, %cst_4 {dimension_numbers = #tpu.dot_dimension_numbers<[1], [0], [0], [1], [0, 0, 1, 1], [], []>} : vector<1024x64xf32>, vector<64x128xf32>, vector<1024x128xf32> -> vector<1024x128xf32>
    %8 = vector.broadcast %1 : vector<1x128xf32> to vector<1024x128xf32>
    %9 = arith.addf %7, %8 : vector<1024x128xf32>
    %10 = math.tanh %9 : vector<1024x128xf32>
    %11 = vector.extract_strided_slice %10 {offsets = [0, 0], sizes = [8, 128], strides = [1, 1]} : vector<1024x128xf32> to vector<8x128xf32>
    %12 = vector.extract_strided_slice %10 {offsets = [8, 0], sizes = [8, 128], strides = [1, 1]} : vector<1024x128xf32> to vector<8x128xf32>
    %13 = vector.extract_strided_slice %10 {offsets = [16, 0], sizes = [8, 128], strides = [1, 1]} : vector<1024x128xf32> to vector<8x128xf32>
    %14 = vector.extract_strided_slice %10 {offsets = [24, 0], sizes = [8, 128], strides = [1, 1]} : vector<1024x128xf32> to vector<8x128xf32>
    %15 = vector.extract_strided_slice %10 {offsets = [32, 0], sizes = [8, 128], strides = [1, 1]} : vector<1024x128xf32> to vector<8x128xf32>
    %16 = vector.extract_strided_slice %10 {offsets = [40, 0], sizes = [8, 128], strides = [1, 1]} : vector<1024x128xf32> to vector<8x128xf32>
    %17 = vector.extract_strided_slice %10 {offsets = [48, 0], sizes = [8, 128], strides = [1, 1]} : vector<1024x128xf32> to vector<8x128xf32>
    %18 = vector.extract_strided_slice %10 {offsets = [56, 0], sizes = [8, 128], strides = [1, 1]} : vector<1024x128xf32> to vector<8x128xf32>
    %19 = vector.extract_strided_slice %10 {offsets = [64, 0], sizes = [8, 128], strides = [1, 1]} : vector<1024x128xf32> to vector<8x128xf32>
    %20 = vector.extract_strided_slice %10 {offsets = [72, 0], sizes = [8, 128], strides = [1, 1]} : vector<1024x128xf32> to vector<8x128xf32>
    %21 = vector.extract_strided_slice %10 {offsets = [80, 0], sizes = [8, 128], strides = [1, 1]} : vector<1024x128xf32> to vector<8x128xf32>
    %22 = vector.extract_strided_slice %10 {offsets = [88, 0], sizes = [8, 128], strides = [1, 1]} : vector<1024x128xf32> to vector<8x128xf32>
    %23 = vector.extract_strided_slice %10 {offsets = [96, 0], sizes = [8, 128], strides = [1, 1]} : vector<1024x128xf32> to vector<8x128xf32>
    %24 = vector.extract_strided_slice %10 {offsets = [104, 0], sizes = [8, 128], strides = [1, 1]} : vector<1024x128xf32> to vector<8x128xf32>
    %25 = vector.extract_strided_slice %10 {offsets = [112, 0], sizes = [8, 128], strides = [1, 1]} : vector<1024x128xf32> to vector<8x128xf32>
    %26 = vector.extract_strided_slice %10 {offsets = [120, 0], sizes = [8, 128], strides = [1, 1]} : vector<1024x128xf32> to vector<8x128xf32>
    %27 = vector.extract_strided_slice %10 {offsets = [128, 0], sizes = [8, 128], strides = [1, 1]} : vector<1024x128xf32> to vector<8x128xf32>
    %28 = vector.extract_strided_slice %10 {offsets = [136, 0], sizes = [8, 128], strides = [1, 1]} : vector<1024x128xf32> to vector<8x128xf32>
    %29 = vector.extract_strided_slice %10 {offsets = [144, 0], sizes = [8, 128], strides = [1, 1]} : vector<1024x128xf32> to vector<8x128xf32>
    %30 = vector.extract_strided_slice %10 {offsets = [152, 0], sizes = [8, 128], strides = [1, 1]} : vector<1024x128xf32> to vector<8x128xf32>
    %31 = vector.extract_strided_slice %10 {offsets = [160, 0], sizes = [8, 128], strides = [1, 1]} : vector<1024x128xf32> to vector<8x128xf32>
    %32 = vector.extract_strided_slice %10 {offsets = [168, 0], sizes = [8, 128], strides = [1, 1]} : vector<1024x128xf32> to vector<8x128xf32>
    %33 = vector.extract_strided_slice %10 {offsets = [176, 0], sizes = [8, 128], strides = [1, 1]} : vector<1024x128xf32> to vector<8x128xf32>
    %34 = vector.extract_strided_slice %10 {offsets = [184, 0], sizes = [8, 128], strides = [1, 1]} : vector<1024x128xf32> to vector<8x128xf32>
    %35 = vector.extract_strided_slice %10 {offsets = [192, 0], sizes = [8, 128], strides = [1, 1]} : vector<1024x128xf32> to vector<8x128xf32>
    %36 = vector.extract_strided_slice %10 {offsets = [200, 0], sizes = [8, 128], strides = [1, 1]} : vector<1024x128xf32> to vector<8x128xf32>
    %37 = vector.extract_strided_slice %10 {offsets = [208, 0], sizes = [8, 128], strides = [1, 1]} : vector<1024x128xf32> to vector<8x128xf32>
    %38 = vector.extract_strided_slice %10 {offsets = [216, 0], sizes = [8, 128], strides = [1, 1]} : vector<1024x128xf32> to vector<8x128xf32>
    %39 = vector.extract_strided_slice %10 {offsets = [224, 0], sizes = [8, 128], strides = [1, 1]} : vector<1024x128xf32> to vector<8x128xf32>
    %40 = vector.extract_strided_slice %10 {offsets = [232, 0], sizes = [8, 128], strides = [1, 1]} : vector<1024x128xf32> to vector<8x128xf32>
    %41 = vector.extract_strided_slice %10 {offsets = [240, 0], sizes = [8, 128], strides = [1, 1]} : vector<1024x128xf32> to vector<8x128xf32>
    %42 = vector.extract_strided_slice %10 {offsets = [248, 0], sizes = [8, 128], strides = [1, 1]} : vector<1024x128xf32> to vector<8x128xf32>
    %43 = vector.extract_strided_slice %10 {offsets = [256, 0], sizes = [8, 128], strides = [1, 1]} : vector<1024x128xf32> to vector<8x128xf32>
    %44 = vector.extract_strided_slice %10 {offsets = [264, 0], sizes = [8, 128], strides = [1, 1]} : vector<1024x128xf32> to vector<8x128xf32>
    %45 = vector.extract_strided_slice %10 {offsets = [272, 0], sizes = [8, 128], strides = [1, 1]} : vector<1024x128xf32> to vector<8x128xf32>
    %46 = vector.extract_strided_slice %10 {offsets = [280, 0], sizes = [8, 128], strides = [1, 1]} : vector<1024x128xf32> to vector<8x128xf32>
    %47 = vector.extract_strided_slice %10 {offsets = [288, 0], sizes = [8, 128], strides = [1, 1]} : vector<1024x128xf32> to vector<8x128xf32>
    %48 = vector.extract_strided_slice %10 {offsets = [296, 0], sizes = [8, 128], strides = [1, 1]} : vector<1024x128xf32> to vector<8x128xf32>
    %49 = vector.extract_strided_slice %10 {offsets = [304, 0], sizes = [8, 128], strides = [1, 1]} : vector<1024x128xf32> to vector<8x128xf32>
    %50 = vector.extract_strided_slice %10 {offsets = [312, 0], sizes = [8, 128], strides = [1, 1]} : vector<1024x128xf32> to vector<8x128xf32>
    %51 = vector.extract_strided_slice %10 {offsets = [320, 0], sizes = [8, 128], strides = [1, 1]} : vector<1024x128xf32> to vector<8x128xf32>
    %52 = vector.extract_strided_slice %10 {offsets = [328, 0], sizes = [8, 128], strides = [1, 1]} : vector<1024x128xf32> to vector<8x128xf32>
    %53 = vector.extract_strided_slice %10 {offsets = [336, 0], sizes = [8, 128], strides = [1, 1]} : vector<1024x128xf32> to vector<8x128xf32>
    %54 = vector.extract_strided_slice %10 {offsets = [344, 0], sizes = [8, 128], strides = [1, 1]} : vector<1024x128xf32> to vector<8x128xf32>
    %55 = vector.extract_strided_slice %10 {offsets = [352, 0], sizes = [8, 128], strides = [1, 1]} : vector<1024x128xf32> to vector<8x128xf32>
    %56 = vector.extract_strided_slice %10 {offsets = [360, 0], sizes = [8, 128], strides = [1, 1]} : vector<1024x128xf32> to vector<8x128xf32>
    %57 = vector.extract_strided_slice %10 {offsets = [368, 0], sizes = [8, 128], strides = [1, 1]} : vector<1024x128xf32> to vector<8x128xf32>
    %58 = vector.extract_strided_slice %10 {offsets = [376, 0], sizes = [8, 128], strides = [1, 1]} : vector<1024x128xf32> to vector<8x128xf32>
    %59 = vector.extract_strided_slice %10 {offsets = [384, 0], sizes = [8, 128], strides = [1, 1]} : vector<1024x128xf32> to vector<8x128xf32>
    %60 = vector.extract_strided_slice %10 {offsets = [392, 0], sizes = [8, 128], strides = [1, 1]} : vector<1024x128xf32> to vector<8x128xf32>
    %61 = vector.extract_strided_slice %10 {offsets = [400, 0], sizes = [8, 128], strides = [1, 1]} : vector<1024x128xf32> to vector<8x128xf32>
    %62 = vector.extract_strided_slice %10 {offsets = [408, 0], sizes = [8, 128], strides = [1, 1]} : vector<1024x128xf32> to vector<8x128xf32>
    %63 = vector.extract_strided_slice %10 {offsets = [416, 0], sizes = [8, 128], strides = [1, 1]} : vector<1024x128xf32> to vector<8x128xf32>
    %64 = vector.extract_strided_slice %10 {offsets = [424, 0], sizes = [8, 128], strides = [1, 1]} : vector<1024x128xf32> to vector<8x128xf32>
    %65 = vector.extract_strided_slice %10 {offsets = [432, 0], sizes = [8, 128], strides = [1, 1]} : vector<1024x128xf32> to vector<8x128xf32>
    %66 = vector.extract_strided_slice %10 {offsets = [440, 0], sizes = [8, 128], strides = [1, 1]} : vector<1024x128xf32> to vector<8x128xf32>
    %67 = vector.extract_strided_slice %10 {offsets = [448, 0], sizes = [8, 128], strides = [1, 1]} : vector<1024x128xf32> to vector<8x128xf32>
    %68 = vector.extract_strided_slice %10 {offsets = [456, 0], sizes = [8, 128], strides = [1, 1]} : vector<1024x128xf32> to vector<8x128xf32>
    %69 = vector.extract_strided_slice %10 {offsets = [464, 0], sizes = [8, 128], strides = [1, 1]} : vector<1024x128xf32> to vector<8x128xf32>
    %70 = vector.extract_strided_slice %10 {offsets = [472, 0], sizes = [8, 128], strides = [1, 1]} : vector<1024x128xf32> to vector<8x128xf32>
    %71 = vector.extract_strided_slice %10 {offsets = [480, 0], sizes = [8, 128], strides = [1, 1]} : vector<1024x128xf32> to vector<8x128xf32>
    %72 = vector.extract_strided_slice %10 {offsets = [488, 0], sizes = [8, 128], strides = [1, 1]} : vector<1024x128xf32> to vector<8x128xf32>
    %73 = vector.extract_strided_slice %10 {offsets = [496, 0], sizes = [8, 128], strides = [1, 1]} : vector<1024x128xf32> to vector<8x128xf32>
    %74 = vector.extract_strided_slice %10 {offsets = [504, 0], sizes = [8, 128], strides = [1, 1]} : vector<1024x128xf32> to vector<8x128xf32>
    %75 = vector.extract_strided_slice %10 {offsets = [512, 0], sizes = [8, 128], strides = [1, 1]} : vector<1024x128xf32> to vector<8x128xf32>
    %76 = vector.extract_strided_slice %10 {offsets = [520, 0], sizes = [8, 128], strides = [1, 1]} : vector<1024x128xf32> to vector<8x128xf32>
    %77 = vector.extract_strided_slice %10 {offsets = [528, 0], sizes = [8, 128], strides = [1, 1]} : vector<1024x128xf32> to vector<8x128xf32>
    %78 = vector.extract_strided_slice %10 {offsets = [536, 0], sizes = [8, 128], strides = [1, 1]} : vector<1024x128xf32> to vector<8x128xf32>
    %79 = vector.extract_strided_slice %10 {offsets = [544, 0], sizes = [8, 128], strides = [1, 1]} : vector<1024x128xf32> to vector<8x128xf32>
    %80 = vector.extract_strided_slice %10 {offsets = [552, 0], sizes = [8, 128], strides = [1, 1]} : vector<1024x128xf32> to vector<8x128xf32>
    %81 = vector.extract_strided_slice %10 {offsets = [560, 0], sizes = [8, 128], strides = [1, 1]} : vector<1024x128xf32> to vector<8x128xf32>
    %82 = vector.extract_strided_slice %10 {offsets = [568, 0], sizes = [8, 128], strides = [1, 1]} : vector<1024x128xf32> to vector<8x128xf32>
    %83 = vector.extract_strided_slice %10 {offsets = [576, 0], sizes = [8, 128], strides = [1, 1]} : vector<1024x128xf32> to vector<8x128xf32>
    %84 = vector.extract_strided_slice %10 {offsets = [584, 0], sizes = [8, 128], strides = [1, 1]} : vector<1024x128xf32> to vector<8x128xf32>
    %85 = vector.extract_strided_slice %10 {offsets = [592, 0], sizes = [8, 128], strides = [1, 1]} : vector<1024x128xf32> to vector<8x128xf32>
    %86 = vector.extract_strided_slice %10 {offsets = [600, 0], sizes = [8, 128], strides = [1, 1]} : vector<1024x128xf32> to vector<8x128xf32>
    %87 = vector.extract_strided_slice %10 {offsets = [608, 0], sizes = [8, 128], strides = [1, 1]} : vector<1024x128xf32> to vector<8x128xf32>
    %88 = vector.extract_strided_slice %10 {offsets = [616, 0], sizes = [8, 128], strides = [1, 1]} : vector<1024x128xf32> to vector<8x128xf32>
    %89 = vector.extract_strided_slice %10 {offsets = [624, 0], sizes = [8, 128], strides = [1, 1]} : vector<1024x128xf32> to vector<8x128xf32>
    %90 = vector.extract_strided_slice %10 {offsets = [632, 0], sizes = [8, 128], strides = [1, 1]} : vector<1024x128xf32> to vector<8x128xf32>
    %91 = vector.extract_strided_slice %10 {offsets = [640, 0], sizes = [8, 128], strides = [1, 1]} : vector<1024x128xf32> to vector<8x128xf32>
    %92 = vector.extract_strided_slice %10 {offsets = [648, 0], sizes = [8, 128], strides = [1, 1]} : vector<1024x128xf32> to vector<8x128xf32>
    %93 = vector.extract_strided_slice %10 {offsets = [656, 0], sizes = [8, 128], strides = [1, 1]} : vector<1024x128xf32> to vector<8x128xf32>
    %94 = vector.extract_strided_slice %10 {offsets = [664, 0], sizes = [8, 128], strides = [1, 1]} : vector<1024x128xf32> to vector<8x128xf32>
    %95 = vector.extract_strided_slice %10 {offsets = [672, 0], sizes = [8, 128], strides = [1, 1]} : vector<1024x128xf32> to vector<8x128xf32>
    %96 = vector.extract_strided_slice %10 {offsets = [680, 0], sizes = [8, 128], strides = [1, 1]} : vector<1024x128xf32> to vector<8x128xf32>
    %97 = vector.extract_strided_slice %10 {offsets = [688, 0], sizes = [8, 128], strides = [1, 1]} : vector<1024x128xf32> to vector<8x128xf32>
    %98 = vector.extract_strided_slice %10 {offsets = [696, 0], sizes = [8, 128], strides = [1, 1]} : vector<1024x128xf32> to vector<8x128xf32>
    %99 = vector.extract_strided_slice %10 {offsets = [704, 0], sizes = [8, 128], strides = [1, 1]} : vector<1024x128xf32> to vector<8x128xf32>
    %100 = vector.extract_strided_slice %10 {offsets = [712, 0], sizes = [8, 128], strides = [1, 1]} : vector<1024x128xf32> to vector<8x128xf32>
    %101 = vector.extract_strided_slice %10 {offsets = [720, 0], sizes = [8, 128], strides = [1, 1]} : vector<1024x128xf32> to vector<8x128xf32>
    %102 = vector.extract_strided_slice %10 {offsets = [728, 0], sizes = [8, 128], strides = [1, 1]} : vector<1024x128xf32> to vector<8x128xf32>
    %103 = vector.extract_strided_slice %10 {offsets = [736, 0], sizes = [8, 128], strides = [1, 1]} : vector<1024x128xf32> to vector<8x128xf32>
    %104 = vector.extract_strided_slice %10 {offsets = [744, 0], sizes = [8, 128], strides = [1, 1]} : vector<1024x128xf32> to vector<8x128xf32>
    %105 = vector.extract_strided_slice %10 {offsets = [752, 0], sizes = [8, 128], strides = [1, 1]} : vector<1024x128xf32> to vector<8x128xf32>
    %106 = vector.extract_strided_slice %10 {offsets = [760, 0], sizes = [8, 128], strides = [1, 1]} : vector<1024x128xf32> to vector<8x128xf32>
    %107 = vector.extract_strided_slice %10 {offsets = [768, 0], sizes = [8, 128], strides = [1, 1]} : vector<1024x128xf32> to vector<8x128xf32>
    %108 = vector.extract_strided_slice %10 {offsets = [776, 0], sizes = [8, 128], strides = [1, 1]} : vector<1024x128xf32> to vector<8x128xf32>
    %109 = vector.extract_strided_slice %10 {offsets = [784, 0], sizes = [8, 128], strides = [1, 1]} : vector<1024x128xf32> to vector<8x128xf32>
    %110 = vector.extract_strided_slice %10 {offsets = [792, 0], sizes = [8, 128], strides = [1, 1]} : vector<1024x128xf32> to vector<8x128xf32>
    %111 = vector.extract_strided_slice %10 {offsets = [800, 0], sizes = [8, 128], strides = [1, 1]} : vector<1024x128xf32> to vector<8x128xf32>
    %112 = vector.extract_strided_slice %10 {offsets = [808, 0], sizes = [8, 128], strides = [1, 1]} : vector<1024x128xf32> to vector<8x128xf32>
    %113 = vector.extract_strided_slice %10 {offsets = [816, 0], sizes = [8, 128], strides = [1, 1]} : vector<1024x128xf32> to vector<8x128xf32>
    %114 = vector.extract_strided_slice %10 {offsets = [824, 0], sizes = [8, 128], strides = [1, 1]} : vector<1024x128xf32> to vector<8x128xf32>
    %115 = vector.extract_strided_slice %10 {offsets = [832, 0], sizes = [8, 128], strides = [1, 1]} : vector<1024x128xf32> to vector<8x128xf32>
    %116 = vector.extract_strided_slice %10 {offsets = [840, 0], sizes = [8, 128], strides = [1, 1]} : vector<1024x128xf32> to vector<8x128xf32>
    %117 = vector.extract_strided_slice %10 {offsets = [848, 0], sizes = [8, 128], strides = [1, 1]} : vector<1024x128xf32> to vector<8x128xf32>
    %118 = vector.extract_strided_slice %10 {offsets = [856, 0], sizes = [8, 128], strides = [1, 1]} : vector<1024x128xf32> to vector<8x128xf32>
    %119 = vector.extract_strided_slice %10 {offsets = [864, 0], sizes = [8, 128], strides = [1, 1]} : vector<1024x128xf32> to vector<8x128xf32>
    %120 = vector.extract_strided_slice %10 {offsets = [872, 0], sizes = [8, 128], strides = [1, 1]} : vector<1024x128xf32> to vector<8x128xf32>
    %121 = vector.extract_strided_slice %10 {offsets = [880, 0], sizes = [8, 128], strides = [1, 1]} : vector<1024x128xf32> to vector<8x128xf32>
    %122 = vector.extract_strided_slice %10 {offsets = [888, 0], sizes = [8, 128], strides = [1, 1]} : vector<1024x128xf32> to vector<8x128xf32>
    %123 = vector.extract_strided_slice %10 {offsets = [896, 0], sizes = [8, 128], strides = [1, 1]} : vector<1024x128xf32> to vector<8x128xf32>
    %124 = vector.extract_strided_slice %10 {offsets = [904, 0], sizes = [8, 128], strides = [1, 1]} : vector<1024x128xf32> to vector<8x128xf32>
    %125 = vector.extract_strided_slice %10 {offsets = [912, 0], sizes = [8, 128], strides = [1, 1]} : vector<1024x128xf32> to vector<8x128xf32>
    %126 = vector.extract_strided_slice %10 {offsets = [920, 0], sizes = [8, 128], strides = [1, 1]} : vector<1024x128xf32> to vector<8x128xf32>
    %127 = vector.extract_strided_slice %10 {offsets = [928, 0], sizes = [8, 128], strides = [1, 1]} : vector<1024x128xf32> to vector<8x128xf32>
    %128 = vector.extract_strided_slice %10 {offsets = [936, 0], sizes = [8, 128], strides = [1, 1]} : vector<1024x128xf32> to vector<8x128xf32>
    %129 = vector.extract_strided_slice %10 {offsets = [944, 0], sizes = [8, 128], strides = [1, 1]} : vector<1024x128xf32> to vector<8x128xf32>
    %130 = vector.extract_strided_slice %10 {offsets = [952, 0], sizes = [8, 128], strides = [1, 1]} : vector<1024x128xf32> to vector<8x128xf32>
    %131 = vector.extract_strided_slice %10 {offsets = [960, 0], sizes = [8, 128], strides = [1, 1]} : vector<1024x128xf32> to vector<8x128xf32>
    %132 = vector.extract_strided_slice %10 {offsets = [968, 0], sizes = [8, 128], strides = [1, 1]} : vector<1024x128xf32> to vector<8x128xf32>
    %133 = vector.extract_strided_slice %10 {offsets = [976, 0], sizes = [8, 128], strides = [1, 1]} : vector<1024x128xf32> to vector<8x128xf32>
    %134 = vector.extract_strided_slice %10 {offsets = [984, 0], sizes = [8, 128], strides = [1, 1]} : vector<1024x128xf32> to vector<8x128xf32>
    %135 = vector.extract_strided_slice %10 {offsets = [992, 0], sizes = [8, 128], strides = [1, 1]} : vector<1024x128xf32> to vector<8x128xf32>
    %136 = vector.extract_strided_slice %10 {offsets = [1000, 0], sizes = [8, 128], strides = [1, 1]} : vector<1024x128xf32> to vector<8x128xf32>
    %137 = vector.extract_strided_slice %10 {offsets = [1008, 0], sizes = [8, 128], strides = [1, 1]} : vector<1024x128xf32> to vector<8x128xf32>
    %138 = vector.extract_strided_slice %10 {offsets = [1016, 0], sizes = [8, 128], strides = [1, 1]} : vector<1024x128xf32> to vector<8x128xf32>
    %139 = arith.addf %11, %12 : vector<8x128xf32>
    %140 = arith.addf %13, %14 : vector<8x128xf32>
    %141 = arith.addf %15, %16 : vector<8x128xf32>
    %142 = arith.addf %17, %18 : vector<8x128xf32>
    %143 = arith.addf %19, %20 : vector<8x128xf32>
    %144 = arith.addf %21, %22 : vector<8x128xf32>
    %145 = arith.addf %23, %24 : vector<8x128xf32>
    %146 = arith.addf %25, %26 : vector<8x128xf32>
    %147 = arith.addf %27, %28 : vector<8x128xf32>
    %148 = arith.addf %29, %30 : vector<8x128xf32>
    %149 = arith.addf %31, %32 : vector<8x128xf32>
    %150 = arith.addf %33, %34 : vector<8x128xf32>
    %151 = arith.addf %35, %36 : vector<8x128xf32>
    %152 = arith.addf %37, %38 : vector<8x128xf32>
    %153 = arith.addf %39, %40 : vector<8x128xf32>
    %154 = arith.addf %41, %42 : vector<8x128xf32>
    %155 = arith.addf %43, %44 : vector<8x128xf32>
    %156 = arith.addf %45, %46 : vector<8x128xf32>
    %157 = arith.addf %47, %48 : vector<8x128xf32>
    %158 = arith.addf %49, %50 : vector<8x128xf32>
    %159 = arith.addf %51, %52 : vector<8x128xf32>
    %160 = arith.addf %53, %54 : vector<8x128xf32>
    %161 = arith.addf %55, %56 : vector<8x128xf32>
    %162 = arith.addf %57, %58 : vector<8x128xf32>
    %163 = arith.addf %59, %60 : vector<8x128xf32>
    %164 = arith.addf %61, %62 : vector<8x128xf32>
    %165 = arith.addf %63, %64 : vector<8x128xf32>
    %166 = arith.addf %65, %66 : vector<8x128xf32>
    %167 = arith.addf %67, %68 : vector<8x128xf32>
    %168 = arith.addf %69, %70 : vector<8x128xf32>
    %169 = arith.addf %71, %72 : vector<8x128xf32>
    %170 = arith.addf %73, %74 : vector<8x128xf32>
    %171 = arith.addf %75, %76 : vector<8x128xf32>
    %172 = arith.addf %77, %78 : vector<8x128xf32>
    %173 = arith.addf %79, %80 : vector<8x128xf32>
    %174 = arith.addf %81, %82 : vector<8x128xf32>
    %175 = arith.addf %83, %84 : vector<8x128xf32>
    %176 = arith.addf %85, %86 : vector<8x128xf32>
    %177 = arith.addf %87, %88 : vector<8x128xf32>
    %178 = arith.addf %89, %90 : vector<8x128xf32>
    %179 = arith.addf %91, %92 : vector<8x128xf32>
    %180 = arith.addf %93, %94 : vector<8x128xf32>
    %181 = arith.addf %95, %96 : vector<8x128xf32>
    %182 = arith.addf %97, %98 : vector<8x128xf32>
    %183 = arith.addf %99, %100 : vector<8x128xf32>
    %184 = arith.addf %101, %102 : vector<8x128xf32>
    %185 = arith.addf %103, %104 : vector<8x128xf32>
    %186 = arith.addf %105, %106 : vector<8x128xf32>
    %187 = arith.addf %107, %108 : vector<8x128xf32>
    %188 = arith.addf %109, %110 : vector<8x128xf32>
    %189 = arith.addf %111, %112 : vector<8x128xf32>
    %190 = arith.addf %113, %114 : vector<8x128xf32>
    %191 = arith.addf %115, %116 : vector<8x128xf32>
    %192 = arith.addf %117, %118 : vector<8x128xf32>
    %193 = arith.addf %119, %120 : vector<8x128xf32>
    %194 = arith.addf %121, %122 : vector<8x128xf32>
    %195 = arith.addf %123, %124 : vector<8x128xf32>
    %196 = arith.addf %125, %126 : vector<8x128xf32>
    %197 = arith.addf %127, %128 : vector<8x128xf32>
    %198 = arith.addf %129, %130 : vector<8x128xf32>
    %199 = arith.addf %131, %132 : vector<8x128xf32>
    %200 = arith.addf %133, %134 : vector<8x128xf32>
    %201 = arith.addf %135, %136 : vector<8x128xf32>
    %202 = arith.addf %137, %138 : vector<8x128xf32>
    %203 = arith.addf %139, %140 : vector<8x128xf32>
    %204 = arith.addf %141, %142 : vector<8x128xf32>
    %205 = arith.addf %143, %144 : vector<8x128xf32>
    %206 = arith.addf %145, %146 : vector<8x128xf32>
    %207 = arith.addf %147, %148 : vector<8x128xf32>
    %208 = arith.addf %149, %150 : vector<8x128xf32>
    %209 = arith.addf %151, %152 : vector<8x128xf32>
    %210 = arith.addf %153, %154 : vector<8x128xf32>
    %211 = arith.addf %155, %156 : vector<8x128xf32>
    %212 = arith.addf %157, %158 : vector<8x128xf32>
    %213 = arith.addf %159, %160 : vector<8x128xf32>
    %214 = arith.addf %161, %162 : vector<8x128xf32>
    %215 = arith.addf %163, %164 : vector<8x128xf32>
    %216 = arith.addf %165, %166 : vector<8x128xf32>
    %217 = arith.addf %167, %168 : vector<8x128xf32>
    %218 = arith.addf %169, %170 : vector<8x128xf32>
    %219 = arith.addf %171, %172 : vector<8x128xf32>
    %220 = arith.addf %173, %174 : vector<8x128xf32>
    %221 = arith.addf %175, %176 : vector<8x128xf32>
    %222 = arith.addf %177, %178 : vector<8x128xf32>
    %223 = arith.addf %179, %180 : vector<8x128xf32>
    %224 = arith.addf %181, %182 : vector<8x128xf32>
    %225 = arith.addf %183, %184 : vector<8x128xf32>
    %226 = arith.addf %185, %186 : vector<8x128xf32>
    %227 = arith.addf %187, %188 : vector<8x128xf32>
    %228 = arith.addf %189, %190 : vector<8x128xf32>
    %229 = arith.addf %191, %192 : vector<8x128xf32>
    %230 = arith.addf %193, %194 : vector<8x128xf32>
    %231 = arith.addf %195, %196 : vector<8x128xf32>
    %232 = arith.addf %197, %198 : vector<8x128xf32>
    %233 = arith.addf %199, %200 : vector<8x128xf32>
    %234 = arith.addf %201, %202 : vector<8x128xf32>
    %235 = arith.addf %203, %204 : vector<8x128xf32>
    %236 = arith.addf %205, %206 : vector<8x128xf32>
    %237 = arith.addf %207, %208 : vector<8x128xf32>
    %238 = arith.addf %209, %210 : vector<8x128xf32>
    %239 = arith.addf %211, %212 : vector<8x128xf32>
    %240 = arith.addf %213, %214 : vector<8x128xf32>
    %241 = arith.addf %215, %216 : vector<8x128xf32>
    %242 = arith.addf %217, %218 : vector<8x128xf32>
    %243 = arith.addf %219, %220 : vector<8x128xf32>
    %244 = arith.addf %221, %222 : vector<8x128xf32>
    %245 = arith.addf %223, %224 : vector<8x128xf32>
    %246 = arith.addf %225, %226 : vector<8x128xf32>
    %247 = arith.addf %227, %228 : vector<8x128xf32>
    %248 = arith.addf %229, %230 : vector<8x128xf32>
    %249 = arith.addf %231, %232 : vector<8x128xf32>
    %250 = arith.addf %233, %234 : vector<8x128xf32>
    %251 = arith.addf %235, %236 : vector<8x128xf32>
    %252 = arith.addf %237, %238 : vector<8x128xf32>
    %253 = arith.addf %239, %240 : vector<8x128xf32>
    %254 = arith.addf %241, %242 : vector<8x128xf32>
    %255 = arith.addf %243, %244 : vector<8x128xf32>
    %256 = arith.addf %245, %246 : vector<8x128xf32>
    %257 = arith.addf %247, %248 : vector<8x128xf32>
    %258 = arith.addf %249, %250 : vector<8x128xf32>
    %259 = arith.addf %251, %252 : vector<8x128xf32>
    %260 = arith.addf %253, %254 : vector<8x128xf32>
    %261 = arith.addf %255, %256 : vector<8x128xf32>
    %262 = arith.addf %257, %258 : vector<8x128xf32>
    %263 = arith.addf %259, %260 : vector<8x128xf32>
    %264 = arith.addf %261, %262 : vector<8x128xf32>
    %265 = arith.addf %263, %264 : vector<8x128xf32>
    %266 = arith.addf %2, %265 : vector<8x128xf32>
    %c1_i32 = arith.constant 1 : i32
    %c0_5 = arith.constant 0 : index
    %c0_6 = arith.constant 0 : index
    %c0_7 = arith.constant 0 : index
    %267 = vector.load %arg4[%c0_5, %c0_6, %c0_7] : memref<1x8x128xf32, #tpu.memory_space<vmem>>, vector<1x8x128xf32>
    %268 = vector.shape_cast %267 : vector<1x8x128xf32> to vector<8x128xf32>
    %269 = vector.shape_cast %266 : vector<8x128xf32> to vector<1x8x128xf32>
    tpu.vector_store %arg4[%c0_5, %c0_6, %c0_7], %269 {strides = array<i32>} : memref<1x8x128xf32, #tpu.memory_space<vmem>>, vector<1x8x128xf32>,
    return
  }
  func.func @transform_0(%arg0: i32) -> (i32, i32) {
    %c0_i32 = arith.constant 0 : i32
    %c0_i32_0 = arith.constant 0 : i32
    return %arg0, %c0_i32 : i32, i32
  }
  func.func @transform_1(%arg0: i32) -> (i32, i32) {
    %c0_i32 = arith.constant 0 : i32
    %c0_i32_0 = arith.constant 0 : i32
    %c0_i32_1 = arith.constant 0 : i32
    return %c0_i32, %c0_i32_0 : i32, i32
  }
  func.func @transform_2(%arg0: i32) -> (i32, i32) {
    %c0_i32 = arith.constant 0 : i32
    %c0_i32_0 = arith.constant 0 : i32
    %c0_i32_1 = arith.constant 0 : i32
    return %c0_i32, %c0_i32_0 : i32, i32
  }
  func.func @transform_3(%arg0: i32) -> (i32, i32, i32) {
    %c0_i32 = arith.constant 0 : i32
    %c0_i32_0 = arith.constant 0 : i32
    %c0_i32_1 = arith.constant 0 : i32
    return %arg0, %c0_i32, %c0_i32_0 : i32, i32, i32
  }
}

</mosaic_0001>

<llo_original>
// kernel: tpu_custom_call.1
$region0: #{tpu_custom_call.1}
  #allocation0 [shape = 'u32[]', space=smem, size = 0x4, offset = 0x4, fixed_abs, tag = 'smem constant byte address 0x4 - core index']
  #allocation1 [shape = 'u32[144,128]{1,0:T(1,128)}', space=vmem, size = 0x12000, scoped, tag = 'internal scratch']
  %s0 = inlined_call_operand.vmem [shape: f32[1024,64], index: 0, kind: input, shape index: {}]
  %s1 = inlined_call_operand.vmem [shape: f32[64,128], index: 1, kind: input, shape index: {}]
  %s2 = inlined_call_operand.vmem [shape: f32[1,128], index: 2, kind: input, shape index: {}]
  %s3 = inlined_call_operand.hbm [shape: f32[1,8,128], index: 3, kind: output, shape index: {}]
  %s4 = sld [smem:[#allocation0]]
  $region22: #{tpu_custom_call.1} parent=0
    _
  %s6 = ssub.s32 1, %s4
  %s7 = scalar_select 0, %s6, %s4
  $region1: #{tpu_custom_call.1} parent=0
    #allocation2 [shape = 'u8[4096]{0}', space=vmem, size = 0x1000, scoped, tag = 'output window, operand 0, single buffered']
    #allocation3 [shape = 's32[1]{0}', space=sflag, size = 0x4, scoped, tag = 'scoped memory for tpu_custom_call.1']
    %8 = vsyncpa [#allocation3], 0
    // Predicated region
    $region2: #{tpu_custom_call.1} parent=1 // pred_check
      _
    $region3: #{tpu_custom_call.1} parent=1 // pred_check_branch
      %10 = sbr.rel (0) target = $region5
    $region4: #{tpu_custom_call.1} parent=1 // pred_region
      _
    $region5: #{tpu_custom_call.1} parent=1 // pred_fallthru
      _
    // Predicated region
    $region6: #{tpu_custom_call.1} parent=1 // pred_check
      _
    $region7: #{tpu_custom_call.1} parent=1 // pred_check_branch
      %12 = sbr.rel (0) target = $region9
    $region8: #{tpu_custom_call.1} parent=1 // pred_region
      _
    $region9: #{tpu_custom_call.1} parent=1 // pred_fallthru
      _
    // Predicated region
    $region10: #{tpu_custom_call.1} parent=1 // pred_check
      _
    $region11: #{tpu_custom_call.1} parent=1 // pred_check_branch
      %14 = sbr.rel (0) target = $region13
    $region12: #{tpu_custom_call.1} parent=1 // pred_region
      _
    $region13: #{tpu_custom_call.1} parent=1 // pred_fallthru
      _
    %v15 = vld [vmem:[%s1] sm:$0xff]
    %v16 = vld [vmem:[%s1 + $0x8] sm:$0xff]
    %v17 = vld [vmem:[%s1 + $0x10] sm:$0xff]
    %v18 = vld [vmem:[%s1 + $0x18] sm:$0xff]
    %v19 = vld [vmem:[%s1 + $0x20] sm:$0xff]
    %v20 = vld [vmem:[%s1 + $0x28] sm:$0xff]
    %v21 = vld [vmem:[%s1 + $0x30] sm:$0xff]
    %v22 = vld [vmem:[%s1 + $0x38] sm:$0xff]
    %v23 = vld [vmem:[%s2] sm:$0x1]
    %v24 = vld [vmem:[%s0] sm:$0xff]
    %v25 = vld [vmem:[%s0 + $0x8] sm:$0xff]
    %v26 = vld [vmem:[%s0 + $0x10] sm:$0xff]
    %v27 = vld [vmem:[%s0 + $0x18] sm:$0xff]
    %v28 = vld [vmem:[%s0 + $0x20] sm:$0xff]
    %v29 = vld [vmem:[%s0 + $0x28] sm:$0xff]
    %v30 = vld [vmem:[%s0 + $0x30] sm:$0xff]
    %v31 = vld [vmem:[%s0 + $0x38] sm:$0xff]
    %v32 = vld [vmem:[%s0 + $0x40] sm:$0xff]
    %v33 = vld [vmem:[%s0 + $0x48] sm:$0xff]
    %v34 = vld [vmem:[%s0 + $0x50] sm:$0xff]
    %v35 = vld [vmem:[%s0 + $0x58] sm:$0xff]
    %v36 = vld [vmem:[%s0 + $0x60] sm:$0xff]
    %v37 = vld [vmem:[%s0 + $0x68] sm:$0xff]
    %v38 = vld [vmem:[%s0 + $0x70] sm:$0xff]
    %v39 = vld [vmem:[%s0 + $0x78] sm:$0xff]
    %v40 = vld [vmem:[%s0 + $0x80] sm:$0xff]
    %v41 = vld [vmem:[%s0 + $0x88] sm:$0xff]
    %v42 = vld [vmem:[%s0 + $0x90] sm:$0xff]
    %v43 = vld [vmem:[%s0 + $0x98] sm:$0xff]
    %v44 = vld [vmem:[%s0 + $0xa0] sm:$0xff]
    %v45 = vld [vmem:[%s0 + $0xa8] sm:$0xff]
    %v46 = vld [vmem:[%s0 + $0xb0] sm:$0xff]
    %v47 = vld [vmem:[%s0 + $0xb8] sm:$0xff]
    %v48 = vld [vmem:[%s0 + $0xc0] sm:$0xff]
    %v49 = vld [vmem:[%s0 + $0xc8] sm:$0xff]
    %v50 = vld [vmem:[%s0 + $0xd0] sm:$0xff]
    %v51 = vld [vmem:[%s0 + $0xd8] sm:$0xff]
    %v52 = vld [vmem:[%s0 + $0xe0] sm:$0xff]
    %v53 = vld [vmem:[%s0 + $0xe8] sm:$0xff]
    %v54 = vld [vmem:[%s0 + $0xf0] sm:$0xff]
    %v55 = vld [vmem:[%s0 + $0xf8] sm:$0xff]
    %v56 = vld [vmem:[%s0 + $0x100] sm:$0xff]
    %v57 = vld [vmem:[%s0 + $0x108] sm:$0xff]
    %v58 = vld [vmem:[%s0 + $0x110] sm:$0xff]
    %v59 = vld [vmem:[%s0 + $0x118] sm:$0xff]
    %v60 = vld [vmem:[%s0 + $0x120] sm:$0xff]
    %v61 = vld [vmem:[%s0 + $0x128] sm:$0xff]
    %v62 = vld [vmem:[%s0 + $0x130] sm:$0xff]
    %v63 = vld [vmem:[%s0 + $0x138] sm:$0xff]
    %v64 = vld [vmem:[%s0 + $0x140] sm:$0xff]
    %v65 = vld [vmem:[%s0 + $0x148] sm:$0xff]
    %v66 = vld [vmem:[%s0 + $0x150] sm:$0xff]
    %v67 = vld [vmem:[%s0 + $0x158] sm:$0xff]
    %v68 = vld [vmem:[%s0 + $0x160] sm:$0xff]
    %v69 = vld [vmem:[%s0 + $0x168] sm:$0xff]
    %v70 = vld [vmem:[%s0 + $0x170] sm:$0xff]
    %v71 = vld [vmem:[%s0 + $0x178] sm:$0xff]
    %v72 = vld [vmem:[%s0 + $0x180] sm:$0xff]
    %v73 = vld [vmem:[%s0 + $0x188] sm:$0xff]
    %v74 = vld [vmem:[%s0 + $0x190] sm:$0xff]
    %v75 = vld [vmem:[%s0 + $0x198] sm:$0xff]
    %v76 = vld [vmem:[%s0 + $0x1a0] sm:$0xff]
    %v77 = vld [vmem:[%s0 + $0x1a8] sm:$0xff]
    %v78 = vld [vmem:[%s0 + $0x1b0] sm:$0xff]
    %v79 = vld [vmem:[%s0 + $0x1b8] sm:$0xff]
    %v80 = vld [vmem:[%s0 + $0x1c0] sm:$0xff]
    %v81 = vld [vmem:[%s0 + $0x1c8] sm:$0xff]
    %v82 = vld [vmem:[%s0 + $0x1d0] sm:$0xff]
    %v83 = vld [vmem:[%s0 + $0x1d8] sm:$0xff]
    %v84 = vld [vmem:[%s0 + $0x1e0] sm:$0xff]
    %v85 = vld [vmem:[%s0 + $0x1e8] sm:$0xff]
    %v86 = vld [vmem:[%s0 + $0x1f0] sm:$0xff]
    %v87 = vld [vmem:[%s0 + $0x1f8] sm:$0xff]
    %v88 = vld [vmem:[%s0 + $0x200] sm:$0xff]
    %v89 = vld [vmem:[%s0 + $0x208] sm:$0xff]
    %v90 = vld [vmem:[%s0 + $0x210] sm:$0xff]
    %v91 = vld [vmem:[%s0 + $0x218] sm:$0xff]
    %v92 = vld [vmem:[%s0 + $0x220] sm:$0xff]
    %v93 = vld [vmem:[%s0 + $0x228] sm:$0xff]
    %v94 = vld [vmem:[%s0 + $0x230] sm:$0xff]
    %v95 = vld [vmem:[%s0 + $0x238] sm:$0xff]
    %v96 = vld [vmem:[%s0 + $0x240] sm:$0xff]
    %v97 = vld [vmem:[%s0 + $0x248] sm:$0xff]
    %v98 = vld [vmem:[%s0 + $0x250] sm:$0xff]
    %v99 = vld [vmem:[%s0 + $0x258] sm:$0xff]
    %v100 = vld [vmem:[%s0 + $0x260] sm:$0xff]
    %v101 = vld [vmem:[%s0 + $0x268] sm:$0xff]
    %v102 = vld [vmem:[%s0 + $0x270] sm:$0xff]
    %v103 = vld [vmem:[%s0 + $0x278] sm:$0xff]
    %v104 = vld [vmem:[%s0 + $0x280] sm:$0xff]
    %v105 = vld [vmem:[%s0 + $0x288] sm:$0xff]
    %v106 = vld [vmem:[%s0 + $0x290] sm:$0xff]
    %v107 = vld [vmem:[%s0 + $0x298] sm:$0xff]
    %v108 = vld [vmem:[%s0 + $0x2a0] sm:$0xff]
    %v109 = vld [vmem:[%s0 + $0x2a8] sm:$0xff]
    %v110 = vld [vmem:[%s0 + $0x2b0] sm:$0xff]
    %v111 = vld [vmem:[%s0 + $0x2b8] sm:$0xff]
    %v112 = vld [vmem:[%s0 + $0x2c0] sm:$0xff]
    %v113 = vld [vmem:[%s0 + $0x2c8] sm:$0xff]
    %v114 = vld [vmem:[%s0 + $0x2d0] sm:$0xff]
    %v115 = vld [vmem:[%s0 + $0x2d8] sm:$0xff]
    %v116 = vld [vmem:[%s0 + $0x2e0] sm:$0xff]
    %v117 = vld [vmem:[%s0 + $0x2e8] sm:$0xff]
    %v118 = vld [vmem:[%s0 + $0x2f0] sm:$0xff]
    %v119 = vld [vmem:[%s0 + $0x2f8] sm:$0xff]
    %v120 = vld [vmem:[%s0 + $0x300] sm:$0xff]
    %v121 = vld [vmem:[%s0 + $0x308] sm:$0xff]
    %v122 = vld [vmem:[%s0 + $0x310] sm:$0xff]
    %v123 = vld [vmem:[%s0 + $0x318] sm:$0xff]
    %v124 = vld [vmem:[%s0 + $0x320] sm:$0xff]
    %v125 = vld [vmem:[%s0 + $0x328] sm:$0xff]
    %v126 = vld [vmem:[%s0 + $0x330] sm:$0xff]
    %v127 = vld [vmem:[%s0 + $0x338] sm:$0xff]
    %v128 = vld [vmem:[%s0 + $0x340] sm:$0xff]
    %v129 = vld [vmem:[%s0 + $0x348] sm:$0xff]
    %v130 = vld [vmem:[%s0 + $0x350] sm:$0xff]
    %v131 = vld [vmem:[%s0 + $0x358] sm:$0xff]
    %v132 = vld [vmem:[%s0 + $0x360] sm:$0xff]
    %v133 = vld [vmem:[%s0 + $0x368] sm:$0xff]
    %v134 = vld [vmem:[%s0 + $0x370] sm:$0xff]
    %v135 = vld [vmem:[%s0 + $0x378] sm:$0xff]
    %v136 = vld [vmem:[%s0 + $0x380] sm:$0xff]
    %v137 = vld [vmem:[%s0 + $0x388] sm:$0xff]
    %v138 = vld [vmem:[%s0 + $0x390] sm:$0xff]
    %v139 = vld [vmem:[%s0 + $0x398] sm:$0xff]
    %v140 = vld [vmem:[%s0 + $0x3a0] sm:$0xff]
    %v141 = vld [vmem:[%s0 + $0x3a8] sm:$0xff]
    %v142 = vld [vmem:[%s0 + $0x3b0] sm:$0xff]
    %v143 = vld [vmem:[%s0 + $0x3b8] sm:$0xff]
    %v144 = vld [vmem:[%s0 + $0x3c0] sm:$0xff]
    %v145 = vld [vmem:[%s0 + $0x3c8] sm:$0xff]
    %v146 = vld [vmem:[%s0 + $0x3d0] sm:$0xff]
    %v147 = vld [vmem:[%s0 + $0x3d8] sm:$0xff]
    %v148 = vld [vmem:[%s0 + $0x3e0] sm:$0xff]
    %v149 = vld [vmem:[%s0 + $0x3e8] sm:$0xff]
    %v150 = vld [vmem:[%s0 + $0x3f0] sm:$0xff]
    %v151 = vld [vmem:[%s0 + $0x3f8] sm:$0xff]
    %v153 = vlaneseq
    %v154 = vshrl.u32 %v153, 7
    %v155 = vsub.s32 0, %v154
    %v156 = vrot.slane %v23, %v155
    %vm158 = vcmask 523264
    %v160 = vsel %vm158, %v24, 0
    %v163 = vsel %vm158, %v25, 0
    %v166 = vsel %vm158, %v26, 0
    %v169 = vsel %vm158, %v27, 0
    %v172 = vsel %vm158, %v28, 0
    %v175 = vsel %vm158, %v29, 0
    %v178 = vsel %vm158, %v30, 0
    %v181 = vsel %vm158, %v31, 0
    %v184 = vsel %vm158, %v32, 0
    %v187 = vsel %vm158, %v33, 0
    %v190 = vsel %vm158, %v34, 0
    %v193 = vsel %vm158, %v35, 0
    %v196 = vsel %vm158, %v36, 0
    %v199 = vsel %vm158, %v37, 0
    %v202 = vsel %vm158, %v38, 0
    %v205 = vsel %vm158, %v39, 0
    %v208 = vsel %vm158, %v40, 0
    %v211 = vsel %vm158, %v41, 0
    %v214 = vsel %vm158, %v42, 0
    %v217 = vsel %vm158, %v43, 0
    %v220 = vsel %vm158, %v44, 0
    %v223 = vsel %vm158, %v45, 0
    %v226 = vsel %vm158, %v46, 0
    %v229 = vsel %vm158, %v47, 0
    %v232 = vsel %vm158, %v48, 0
    %v235 = vsel %vm158, %v49, 0
    %v238 = vsel %vm158, %v50, 0
    %v241 = vsel %vm158, %v51, 0
    %v244 = vsel %vm158, %v52, 0
    %v247 = vsel %vm158, %v53, 0
    %v250 = vsel %vm158, %v54, 0
    %v253 = vsel %vm158, %v55, 0
    %v256 = vsel %vm158, %v56, 0
    %v259 = vsel %vm158, %v57, 0
    %v262 = vsel %vm158, %v58, 0
    %v265 = vsel %vm158, %v59, 0
    %v268 = vsel %vm158, %v60, 0
    %v271 = vsel %vm158, %v61, 0
    %v274 = vsel %vm158, %v62, 0
    %v277 = vsel %vm158, %v63, 0
    %v280 = vsel %vm158, %v64, 0
    %v283 = vsel %vm158, %v65, 0
    %v286 = vsel %vm158, %v66, 0
    %v289 = vsel %vm158, %v67, 0
    %v292 = vsel %vm158, %v68, 0
    %v295 = vsel %vm158, %v69, 0
    %v298 = vsel %vm158, %v70, 0
    %v301 = vsel %vm158, %v71, 0
    %v304 = vsel %vm158, %v72, 0
    %v307 = vsel %vm158, %v73, 0
    %v310 = vsel %vm158, %v74, 0
    %v313 = vsel %vm158, %v75, 0
    %v316 = vsel %vm158, %v76, 0
    %v319 = vsel %vm158, %v77, 0
    %v322 = vsel %vm158, %v78, 0
    %v325 = vsel %vm158, %v79, 0
    %v328 = vsel %vm158, %v80, 0
    %v331 = vsel %vm158, %v81, 0
    %v334 = vsel %vm158, %v82, 0
    %v337 = vsel %vm158, %v83, 0
    %v340 = vsel %vm158, %v84, 0
    %v343 = vsel %vm158, %v85, 0
    %v346 = vsel %vm158, %v86, 0
    %v349 = vsel %vm158, %v87, 0
    %v352 = vsel %vm158, %v88, 0
    %v355 = vsel %vm158, %v89, 0
    %v358 = vsel %vm158, %v90, 0
    %v361 = vsel %vm158, %v91, 0
    %v364 = vsel %vm158, %v92, 0
    %v367 = vsel %vm158, %v93, 0
    %v370 = vsel %vm158, %v94, 0
    %v373 = vsel %vm158, %v95, 0
    %v376 = vsel %vm158, %v96, 0
    %v379 = vsel %vm158, %v97, 0
    %v382 = vsel %vm158, %v98, 0
    %v385 = vsel %vm158, %v99, 0
    %v388 = vsel %vm158, %v100, 0
    %v391 = vsel %vm158, %v101, 0
    %v394 = vsel %vm158, %v102, 0
    %v397 = vsel %vm158, %v103, 0
    %v400 = vsel %vm158, %v104, 0
    %v403 = vsel %vm158, %v105, 0
    %v406 = vsel %vm158, %v106, 0
    %v409 = vsel %vm158, %v107, 0
    %v412 = vsel %vm158, %v108, 0
    %v415 = vsel %vm158, %v109, 0
    %v418 = vsel %vm158, %v110, 0
    %v421 = vsel %vm158, %v111, 0
    %v424 = vsel %vm158, %v112, 0
    %v427 = vsel %vm158, %v113, 0
    %v430 = vsel %vm158, %v114, 0
    %v433 = vsel %vm158, %v115, 0
    %v436 = vsel %vm158, %v116, 0
    %v439 = vsel %vm158, %v117, 0
    %v442 = vsel %vm158, %v118, 0
    %v445 = vsel %vm158, %v119, 0
    %v448 = vsel %vm158, %v120, 0
    %v451 = vsel %vm158, %v121, 0
    %v454 = vsel %vm158, %v122, 0
    %v457 = vsel %vm158, %v123, 0
    %v460 = vsel %vm158, %v124, 0
    %v463 = vsel %vm158, %v125, 0
    %v466 = vsel %vm158, %v126, 0
    %v469 = vsel %vm158, %v127, 0
    %v472 = vsel %vm158, %v128, 0
    %v475 = vsel %vm158, %v129, 0
    %v478 = vsel %vm158, %v130, 0
    %v481 = vsel %vm158, %v131, 0
    %v484 = vsel %vm158, %v132, 0
    %v487 = vsel %vm158, %v133, 0
    %v490 = vsel %vm158, %v134, 0
    %v493 = vsel %vm158, %v135, 0
    %v496 = vsel %vm158, %v136, 0
    %v499 = vsel %vm158, %v137, 0
    %v502 = vsel %vm158, %v138, 0
    %v505 = vsel %vm158, %v139, 0
    %v508 = vsel %vm158, %v140, 0
    %v511 = vsel %vm158, %v141, 0
    %v514 = vsel %vm158, %v142, 0
    %v517 = vsel %vm158, %v143, 0
    %v520 = vsel %vm158, %v144, 0
    %v523 = vsel %vm158, %v145, 0
    %v526 = vsel %vm158, %v146, 0
    %v529 = vsel %vm158, %v147, 0
    %v532 = vsel %vm158, %v148, 0
    %v535 = vsel %vm158, %v149, 0
    %v538 = vsel %vm158, %v150, 0
    %v541 = vsel %vm158, %v151, 0
    %543 = vmatprep.subr.mxu0 0.0
    %544 = vmatpush1.msra.mxu0 0.0
    %545 = vmatprep.subr.mxu0 0.0
    %546 = vmatpush1.msra.mxu0 0.0
    %547 = vmatprep.subr.mxu0 0.0
    %548 = vmatpush1.msra.mxu0 0.0
    %549 = vmatprep.subr.mxu0 0.0
    %550 = vmatpush1.msra.mxu0 0.0
    %551 = vmatprep.subr.mxu0 0.0
    %552 = vmatpush1.msra.mxu0 0.0
    %553 = vmatprep.subr.mxu0 0.0
    %554 = vmatpush1.msra.mxu0 0.0
    %555 = vmatprep.subr.mxu0 0.0
    %556 = vmatpush1.msra.mxu0 0.0
    %557 = vmatprep.subr.mxu0 0.0
    %558 = vmatpush1.msra.mxu0 0.0
    %559 = vmatprep.subr.mxu0 0.0
    %560 = vmatpush1.msra.mxu0 %v22
    %561 = vmatprep.subr.mxu0 0.0
    %562 = vmatpush1.msra.mxu0 %v21
    %563 = vmatprep.subr.mxu0 0.0
    %564 = vmatpush1.msra.mxu0 %v20
    %565 = vmatprep.subr.mxu0 0.0
    %566 = vmatpush1.msra.mxu0 %v19
    %567 = vmatprep.subr.mxu0 0.0
    %568 = vmatpush1.msra.mxu0 %v18
    %569 = vmatprep.subr.mxu0 0.0
    %570 = vmatpush1.msra.mxu0 %v17
    %571 = vmatprep.subr.mxu0 0.0
    %572 = vmatpush1.msra.mxu0 %v16
    %573 = vmatprep.subr.mxu0 0.0
    %574 = vmatpush1.msra.mxu0 %v15
    %575 = vmatprep.subr.mxu0 0.0
    %576 = vmatpush2.msra.mxu0 0.0
    %577 = vmatprep.subr.mxu0 0.0
    %578 = vmatpush2.msra.mxu0 0.0
    %579 = vmatprep.subr.mxu0 0.0
    %580 = vmatpush2.msra.mxu0 0.0
    %581 = vmatprep.subr.mxu0 0.0
    %582 = vmatpush2.msra.mxu0 0.0
    %583 = vmatprep.subr.mxu0 0.0
    %584 = vmatpush2.msra.mxu0 0.0
    %585 = vmatprep.subr.mxu0 0.0
    %586 = vmatpush2.msra.mxu0 0.0
    %587 = vmatprep.subr.mxu0 0.0
    %588 = vmatpush2.msra.mxu0 0.0
    %589 = vmatprep.subr.mxu0 0.0
    %590 = vmatpush2.msra.mxu0 0.0
    %591 = vmatprep.subr.mxu0 0.0
    %592 = vmatpush2.msra.mxu0 0.0
    %593 = vmatprep.subr.mxu0 0.0
    %594 = vmatpush2.msra.mxu0 0.0
    %595 = vmatprep.subr.mxu0 0.0
    %596 = vmatpush2.msra.mxu0 0.0
    %597 = vmatprep.subr.mxu0 0.0
    %598 = vmatpush2.msra.mxu0 0.0
    %599 = vmatprep.subr.mxu0 0.0
    %600 = vmatpush2.msra.mxu0 0.0
    %601 = vmatprep.subr.mxu0 0.0
    %602 = vmatpush2.msra.mxu0 0.0
    %603 = vmatprep.subr.mxu0 0.0
    %604 = vmatpush2.msra.mxu0 0.0
    %605 = vmatprep.subr.mxu0 0.0
    %606 = vmatpush2.msra.mxu0 0.0
    %607 = vmatprep.mubr.f32.mxu0 0.0
    %608 = vmatmul.mubr.f32.gmra.mxu0 %v160
    %v609 = vpop.f32.mrf.mxu0
    %v610 = vadd.f32 %v156, %v609
    %v611 = vpop.f32.mrf.mxu0
    %612 = vmatprep.mubr.f32.mxu0 0.0
    %613 = vmatmul.mubr.f32.gmra.mxu0 %v163
    %v614 = vpop.f32.mrf.mxu0
    %v615 = vadd.f32 %v156, %v614
    %v616 = vpop.f32.mrf.mxu0
    %617 = vmatprep.mubr.f32.mxu0 0.0
    %618 = vmatmul.mubr.f32.gmra.mxu0 %v166
    %v619 = vpop.f32.mrf.mxu0
    %v620 = vadd.f32 %v156, %v619
    %v621 = vpop.f32.mrf.mxu0
    %622 = vmatprep.mubr.f32.mxu0 0.0
    %623 = vmatmul.mubr.f32.gmra.mxu0 %v169
    %v624 = vpop.f32.mrf.mxu0
    %v625 = vadd.f32 %v156, %v624
    %v626 = vpop.f32.mrf.mxu0
    %627 = vmatprep.mubr.f32.mxu0 0.0
    %628 = vmatmul.mubr.f32.gmra.mxu0 %v172
    %v629 = vpop.f32.mrf.mxu0
    %v630 = vadd.f32 %v156, %v629
    %v631 = vpop.f32.mrf.mxu0
    %632 = vmatprep.mubr.f32.mxu0 0.0
    %633 = vmatmul.mubr.f32.gmra.mxu0 %v175
    %v634 = vpop.f32.mrf.mxu0
    %v635 = vadd.f32 %v156, %v634
    %v636 = vpop.f32.mrf.mxu0
    %637 = vmatprep.mubr.f32.mxu0 0.0
    %638 = vmatmul.mubr.f32.gmra.mxu0 %v178
    %v639 = vpop.f32.mrf.mxu0
    %v640 = vadd.f32 %v156, %v639
    %v641 = vpop.f32.mrf.mxu0
    %642 = vmatprep.mubr.f32.mxu0 0.0
    %643 = vmatmul.mubr.f32.gmra.mxu0 %v181
    %v644 = vpop.f32.mrf.mxu0
    %v645 = vadd.f32 %v156, %v644
    %v646 = vpop.f32.mrf.mxu0
    %647 = vmatprep.mubr.f32.mxu0 0.0
    %648 = vmatmul.mubr.f32.gmra.mxu0 %v184
    %v649 = vpop.f32.mrf.mxu0
    %v650 = vadd.f32 %v156, %v649
    %v651 = vpop.f32.mrf.mxu0
    %652 = vmatprep.mubr.f32.mxu0 0.0
    %653 = vmatmul.mubr.f32.gmra.mxu0 %v187
    %v654 = vpop.f32.mrf.mxu0
    %v655 = vadd.f32 %v156, %v654
    %v656 = vpop.f32.mrf.mxu0
    %657 = vmatprep.mubr.f32.mxu0 0.0
    %658 = vmatmul.mubr.f32.gmra.mxu0 %v190
    %v659 = vpop.f32.mrf.mxu0
    %v660 = vadd.f32 %v156, %v659
    %v661 = vpop.f32.mrf.mxu0
    %662 = vmatprep.mubr.f32.mxu0 0.0
    %663 = vmatmul.mubr.f32.gmra.mxu0 %v193
    %v664 = vpop.f32.mrf.mxu0
    %v665 = vadd.f32 %v156, %v664
    %v666 = vpop.f32.mrf.mxu0
    %667 = vmatprep.mubr.f32.mxu0 0.0
    %668 = vmatmul.mubr.f32.gmra.mxu0 %v196
    %v669 = vpop.f32.mrf.mxu0
    %v670 = vadd.f32 %v156, %v669
    %v671 = vpop.f32.mrf.mxu0
    %672 = vmatprep.mubr.f32.mxu0 0.0
    %673 = vmatmul.mubr.f32.gmra.mxu0 %v199
    %v674 = vpop.f32.mrf.mxu0
    %v675 = vadd.f32 %v156, %v674
    %v676 = vpop.f32.mrf.mxu0
    %677 = vmatprep.mubr.f32.mxu0 0.0
    %678 = vmatmul.mubr.f32.gmra.mxu0 %v202
    %v679 = vpop.f32.mrf.mxu0
    %v680 = vadd.f32 %v156, %v679
    %v681 = vpop.f32.mrf.mxu0
    %682 = vmatprep.mubr.f32.mxu0 0.0
    %683 = vmatmul.mubr.f32.gmra.mxu0 %v205
    %v684 = vpop.f32.mrf.mxu0
    %v685 = vadd.f32 %v156, %v684
    %v686 = vpop.f32.mrf.mxu0
    %687 = vmatprep.mubr.f32.mxu0 0.0
    %688 = vmatmul.mubr.f32.gmra.mxu0 %v208
    %v689 = vpop.f32.mrf.mxu0
    %v690 = vadd.f32 %v156, %v689
    %v691 = vpop.f32.mrf.mxu0
    %692 = vmatprep.mubr.f32.mxu0 0.0
    %693 = vmatmul.mubr.f32.gmra.mxu0 %v211
    %v694 = vpop.f32.mrf.mxu0
    %v695 = vadd.f32 %v156, %v694
    %v696 = vpop.f32.mrf.mxu0
    %697 = vmatprep.mubr.f32.mxu0 0.0
    %698 = vmatmul.mubr.f32.gmra.mxu0 %v214
    %v699 = vpop.f32.mrf.mxu0
    %v700 = vadd.f32 %v156, %v699
    %v701 = vpop.f32.mrf.mxu0
    %702 = vmatprep.mubr.f32.mxu0 0.0
    %703 = vmatmul.mubr.f32.gmra.mxu0 %v217
    %v704 = vpop.f32.mrf.mxu0
    %v705 = vadd.f32 %v156, %v704
    %v706 = vpop.f32.mrf.mxu0
    %707 = vmatprep.mubr.f32.mxu0 0.0
    %708 = vmatmul.mubr.f32.gmra.mxu0 %v220
    %v709 = vpop.f32.mrf.mxu0
    %v710 = vadd.f32 %v156, %v709
    %v711 = vpop.f32.mrf.mxu0
    %712 = vmatprep.mubr.f32.mxu0 0.0
    %713 = vmatmul.mubr.f32.gmra.mxu0 %v223
    %v714 = vpop.f32.mrf.mxu0
    %v715 = vadd.f32 %v156, %v714
    %v716 = vpop.f32.mrf.mxu0
    %717 = vmatprep.mubr.f32.mxu0 0.0
    %718 = vmatmul.mubr.f32.gmra.mxu0 %v226
    %v719 = vpop.f32.mrf.mxu0
    %v720 = vadd.f32 %v156, %v719
    %v721 = vpop.f32.mrf.mxu0
    %722 = vmatprep.mubr.f32.mxu0 0.0
    %723 = vmatmul.mubr.f32.gmra.mxu0 %v229
    %v724 = vpop.f32.mrf.mxu0
    %v725 = vadd.f32 %v156, %v724
    %v726 = vpop.f32.mrf.mxu0
    %727 = vmatprep.mubr.f32.mxu0 0.0
    %728 = vmatmul.mubr.f32.gmra.mxu0 %v232
    %v729 = vpop.f32.mrf.mxu0
    %v730 = vadd.f32 %v156, %v729
    %v731 = vpop.f32.mrf.mxu0
    %732 = vmatprep.mubr.f32.mxu0 0.0
    %733 = vmatmul.mubr.f32.gmra.mxu0 %v235
    %v734 = vpop.f32.mrf.mxu0
    %v735 = vadd.f32 %v156, %v734
    %v736 = vpop.f32.mrf.mxu0
    %737 = vmatprep.mubr.f32.mxu0 0.0
    %738 = vmatmul.mubr.f32.gmra.mxu0 %v238
    %v739 = vpop.f32.mrf.mxu0
    %v740 = vadd.f32 %v156, %v739
    %v741 = vpop.f32.mrf.mxu0
    %742 = vmatprep.mubr.f32.mxu0 0.0
    %743 = vmatmul.mubr.f32.gmra.mxu0 %v241
    %v744 = vpop.f32.mrf.mxu0
    %v745 = vadd.f32 %v156, %v744
    %v746 = vpop.f32.mrf.mxu0
    %747 = vmatprep.mubr.f32.mxu0 0.0
    %748 = vmatmul.mubr.f32.gmra.mxu0 %v244
    %v749 = vpop.f32.mrf.mxu0
    %v750 = vadd.f32 %v156, %v749
    %v751 = vpop.f32.mrf.mxu0
    %752 = vmatprep.mubr.f32.mxu0 0.0
    %753 = vmatmul.mubr.f32.gmra.mxu0 %v247
    %v754 = vpop.f32.mrf.mxu0
    %v755 = vadd.f32 %v156, %v754
    %v756 = vpop.f32.mrf.mxu0
    %757 = vmatprep.mubr.f32.mxu0 0.0
    %758 = vmatmul.mubr.f32.gmra.mxu0 %v250
    %v759 = vpop.f32.mrf.mxu0
    %v760 = vadd.f32 %v156, %v759
    %v761 = vpop.f32.mrf.mxu0
    %762 = vmatprep.mubr.f32.mxu0 0.0
    %763 = vmatmul.mubr.f32.gmra.mxu0 %v253
    %v764 = vpop.f32.mrf.mxu0
    %v765 = vadd.f32 %v156, %v764
    %v766 = vpop.f32.mrf.mxu0
    %767 = vmatprep.mubr.f32.mxu0 0.0
    %768 = vmatmul.mubr.f32.gmra.mxu0 %v256
    %v769 = vpop.f32.mrf.mxu0
    %v770 = vadd.f32 %v156, %v769
    %v771 = vpop.f32.mrf.mxu0
    %772 = vmatprep.mubr.f32.mxu0 0.0
    %773 = vmatmul.mubr.f32.gmra.mxu0 %v259
    %v774 = vpop.f32.mrf.mxu0
    %v775 = vadd.f32 %v156, %v774
    %v776 = vpop.f32.mrf.mxu0
    %777 = vmatprep.mubr.f32.mxu0 0.0
    %778 = vmatmul.mubr.f32.gmra.mxu0 %v262
    %v779 = vpop.f32.mrf.mxu0
    %v780 = vadd.f32 %v156, %v779
    %v781 = vpop.f32.mrf.mxu0
    %782 = vmatprep.mubr.f32.mxu0 0.0
    %783 = vmatmul.mubr.f32.gmra.mxu0 %v265
    %v784 = vpop.f32.mrf.mxu0
    %v785 = vadd.f32 %v156, %v784
    %v786 = vpop.f32.mrf.mxu0
    %787 = vmatprep.mubr.f32.mxu0 0.0
    %788 = vmatmul.mubr.f32.gmra.mxu0 %v268
    %v789 = vpop.f32.mrf.mxu0
    %v790 = vadd.f32 %v156, %v789
    %v791 = vpop.f32.mrf.mxu0
    %792 = vmatprep.mubr.f32.mxu0 0.0
    %793 = vmatmul.mubr.f32.gmra.mxu0 %v271
    %v794 = vpop.f32.mrf.mxu0
    %v795 = vadd.f32 %v156, %v794
    %v796 = vpop.f32.mrf.mxu0
    %797 = vmatprep.mubr.f32.mxu0 0.0
    %798 = vmatmul.mubr.f32.gmra.mxu0 %v274
    %v799 = vpop.f32.mrf.mxu0
    %v800 = vadd.f32 %v156, %v799
    %v801 = vpop.f32.mrf.mxu0
    %802 = vmatprep.mubr.f32.mxu0 0.0
    %803 = vmatmul.mubr.f32.gmra.mxu0 %v277
    %v804 = vpop.f32.mrf.mxu0
    %v805 = vadd.f32 %v156, %v804
    %v806 = vpop.f32.mrf.mxu0
    %807 = vmatprep.mubr.f32.mxu0 0.0
    %808 = vmatmul.mubr.f32.gmra.mxu0 %v280
    %v809 = vpop.f32.mrf.mxu0
    %v810 = vadd.f32 %v156, %v809
    %v811 = vpop.f32.mrf.mxu0
    %812 = vmatprep.mubr.f32.mxu0 0.0
    %813 = vmatmul.mubr.f32.gmra.mxu0 %v283
    %v814 = vpop.f32.mrf.mxu0
    %v815 = vadd.f32 %v156, %v814
    %v816 = vpop.f32.mrf.mxu0
    %817 = vmatprep.mubr.f32.mxu0 0.0
    %818 = vmatmul.mubr.f32.gmra.mxu0 %v286
    %v819 = vpop.f32.mrf.mxu0
    %v820 = vadd.f32 %v156, %v819
    %v821 = vpop.f32.mrf.mxu0
    %822 = vmatprep.mubr.f32.mxu0 0.0
    %823 = vmatmul.mubr.f32.gmra.mxu0 %v289
    %v824 = vpop.f32.mrf.mxu0
    %v825 = vadd.f32 %v156, %v824
    %v826 = vpop.f32.mrf.mxu0
    %827 = vmatprep.mubr.f32.mxu0 0.0
    %828 = vmatmul.mubr.f32.gmra.mxu0 %v292
    %v829 = vpop.f32.mrf.mxu0
    %v830 = vadd.f32 %v156, %v829
    %v831 = vpop.f32.mrf.mxu0
    %832 = vmatprep.mubr.f32.mxu0 0.0
    %833 = vmatmul.mubr.f32.gmra.mxu0 %v295
    %v834 = vpop.f32.mrf.mxu0
    %v835 = vadd.f32 %v156, %v834
    %v836 = vpop.f32.mrf.mxu0
    %837 = vmatprep.mubr.f32.mxu0 0.0
    %838 = vmatmul.mubr.f32.gmra.mxu0 %v298
    %v839 = vpop.f32.mrf.mxu0
    %v840 = vadd.f32 %v156, %v839
    %v841 = vpop.f32.mrf.mxu0
    %842 = vmatprep.mubr.f32.mxu0 0.0
    %843 = vmatmul.mubr.f32.gmra.mxu0 %v301
    %v844 = vpop.f32.mrf.mxu0
    %v845 = vadd.f32 %v156, %v844
    %v846 = vpop.f32.mrf.mxu0
    %847 = vmatprep.mubr.f32.mxu0 0.0
    %848 = vmatmul.mubr.f32.gmra.mxu0 %v304
    %v849 = vpop.f32.mrf.mxu0
    %v850 = vadd.f32 %v156, %v849
    %v851 = vpop.f32.mrf.mxu0
    %852 = vmatprep.mubr.f32.mxu0 0.0
    %853 = vmatmul.mubr.f32.gmra.mxu0 %v307
    %v854 = vpop.f32.mrf.mxu0
    %v855 = vadd.f32 %v156, %v854
    %v856 = vpop.f32.mrf.mxu0
    %857 = vmatprep.mubr.f32.mxu0 0.0
    %858 = vmatmul.mubr.f32.gmra.mxu0 %v310
    %v859 = vpop.f32.mrf.mxu0
    %v860 = vadd.f32 %v156, %v859
    %v861 = vpop.f32.mrf.mxu0
    %862 = vmatprep.mubr.f32.mxu0 0.0
    %863 = vmatmul.mubr.f32.gmra.mxu0 %v313
    %v864 = vpop.f32.mrf.mxu0
    %v865 = vadd.f32 %v156, %v864
    %v866 = vpop.f32.mrf.mxu0
    %867 = vmatprep.mubr.f32.mxu0 0.0
    %868 = vmatmul.mubr.f32.gmra.mxu0 %v316
    %v869 = vpop.f32.mrf.mxu0
    %v870 = vadd.f32 %v156, %v869
    %v871 = vpop.f32.mrf.mxu0
    %872 = vmatprep.mubr.f32.mxu0 0.0
    %873 = vmatmul.mubr.f32.gmra.mxu0 %v319
    %v874 = vpop.f32.mrf.mxu0
    %v875 = vadd.f32 %v156, %v874
    %v876 = vpop.f32.mrf.mxu0
    %877 = vmatprep.mubr.f32.mxu0 0.0
    %878 = vmatmul.mubr.f32.gmra.mxu0 %v322
    %v879 = vpop.f32.mrf.mxu0
    %v880 = vadd.f32 %v156, %v879
    %v881 = vpop.f32.mrf.mxu0
    %882 = vmatprep.mubr.f32.mxu0 0.0
    %883 = vmatmul.mubr.f32.gmra.mxu0 %v325
    %v884 = vpop.f32.mrf.mxu0
    %v885 = vadd.f32 %v156, %v884
    %v886 = vpop.f32.mrf.mxu0
    %887 = vmatprep.mubr.f32.mxu0 0.0
    %888 = vmatmul.mubr.f32.gmra.mxu0 %v328
    %v889 = vpop.f32.mrf.mxu0
    %v890 = vadd.f32 %v156, %v889
    %v891 = vpop.f32.mrf.mxu0
    %892 = vmatprep.mubr.f32.mxu0 0.0
    %893 = vmatmul.mubr.f32.gmra.mxu0 %v331
    %v894 = vpop.f32.mrf.mxu0
    %v895 = vadd.f32 %v156, %v894
    %v896 = vpop.f32.mrf.mxu0
    %897 = vmatprep.mubr.f32.mxu0 0.0
    %898 = vmatmul.mubr.f32.gmra.mxu0 %v334
    %v899 = vpop.f32.mrf.mxu0
    %v900 = vadd.f32 %v156, %v899
    %v901 = vpop.f32.mrf.mxu0
    %902 = vmatprep.mubr.f32.mxu0 0.0
    %903 = vmatmul.mubr.f32.gmra.mxu0 %v337
    %v904 = vpop.f32.mrf.mxu0
    %v905 = vadd.f32 %v156, %v904
    %v906 = vpop.f32.mrf.mxu0
    %907 = vmatprep.mubr.f32.mxu0 0.0
    %908 = vmatmul.mubr.f32.gmra.mxu0 %v340
    %v909 = vpop.f32.mrf.mxu0
    %v910 = vadd.f32 %v156, %v909
    %v911 = vpop.f32.mrf.mxu0
    %912 = vmatprep.mubr.f32.mxu0 0.0
    %913 = vmatmul.mubr.f32.gmra.mxu0 %v343
    %v914 = vpop.f32.mrf.mxu0
    %v915 = vadd.f32 %v156, %v914
    %v916 = vpop.f32.mrf.mxu0
    %917 = vmatprep.mubr.f32.mxu0 0.0
    %918 = vmatmul.mubr.f32.gmra.mxu0 %v346
    %v919 = vpop.f32.mrf.mxu0
    %v920 = vadd.f32 %v156, %v919
    %v921 = vpop.f32.mrf.mxu0
    %922 = vmatprep.mubr.f32.mxu0 0.0
    %923 = vmatmul.mubr.f32.gmra.mxu0 %v349
    %v924 = vpop.f32.mrf.mxu0
    %v925 = vadd.f32 %v156, %v924
    %v926 = vpop.f32.mrf.mxu0
    %927 = vmatprep.mubr.f32.mxu0 0.0
    %928 = vmatmul.mubr.f32.gmra.mxu0 %v352
    %v929 = vpop.f32.mrf.mxu0
    %v930 = vadd.f32 %v156, %v929
    %v931 = vpop.f32.mrf.mxu0
    %932 = vmatprep.mubr.f32.mxu0 0.0
    %933 = vmatmul.mubr.f32.gmra.mxu0 %v355
    %v934 = vpop.f32.mrf.mxu0
    %v935 = vadd.f32 %v156, %v934
    %v936 = vpop.f32.mrf.mxu0
    %937 = vmatprep.mubr.f32.mxu0 0.0
    %938 = vmatmul.mubr.f32.gmra.mxu0 %v358
    %v939 = vpop.f32.mrf.mxu0
    %v940 = vadd.f32 %v156, %v939
    %v941 = vpop.f32.mrf.mxu0
    %942 = vmatprep.mubr.f32.mxu0 0.0
    %943 = vmatmul.mubr.f32.gmra.mxu0 %v361
    %v944 = vpop.f32.mrf.mxu0
    %v945 = vadd.f32 %v156, %v944
    %v946 = vpop.f32.mrf.mxu0
    %947 = vmatprep.mubr.f32.mxu0 0.0
    %948 = vmatmul.mubr.f32.gmra.mxu0 %v364
    %v949 = vpop.f32.mrf.mxu0
    %v950 = vadd.f32 %v156, %v949
    %v951 = vpop.f32.mrf.mxu0
    %952 = vmatprep.mubr.f32.mxu0 0.0
    %953 = vmatmul.mubr.f32.gmra.mxu0 %v367
    %v954 = vpop.f32.mrf.mxu0
    %v955 = vadd.f32 %v156, %v954
    %v956 = vpop.f32.mrf.mxu0
    %957 = vmatprep.mubr.f32.mxu0 0.0
    %958 = vmatmul.mubr.f32.gmra.mxu0 %v370
    %v959 = vpop.f32.mrf.mxu0
    %v960 = vadd.f32 %v156, %v959
    %v961 = vpop.f32.mrf.mxu0
    %962 = vmatprep.mubr.f32.mxu0 0.0
    %963 = vmatmul.mubr.f32.gmra.mxu0 %v373
    %v964 = vpop.f32.mrf.mxu0
    %v965 = vadd.f32 %v156, %v964
    %v966 = vpop.f32.mrf.mxu0
    %967 = vmatprep.mubr.f32.mxu0 0.0
    %968 = vmatmul.mubr.f32.gmra.mxu0 %v376
    %v969 = vpop.f32.mrf.mxu0
    %v970 = vadd.f32 %v156, %v969
    %v971 = vpop.f32.mrf.mxu0
    %972 = vmatprep.mubr.f32.mxu0 0.0
    %973 = vmatmul.mubr.f32.gmra.mxu0 %v379
    %v974 = vpop.f32.mrf.mxu0
    %v975 = vadd.f32 %v156, %v974
    %v976 = vpop.f32.mrf.mxu0
    %977 = vmatprep.mubr.f32.mxu0 0.0
    %978 = vmatmul.mubr.f32.gmra.mxu0 %v382
    %v979 = vpop.f32.mrf.mxu0
    %v980 = vadd.f32 %v156, %v979
    %v981 = vpop.f32.mrf.mxu0
    %982 = vmatprep.mubr.f32.mxu0 0.0
    %983 = vmatmul.mubr.f32.gmra.mxu0 %v385
    %v984 = vpop.f32.mrf.mxu0
    %v985 = vadd.f32 %v156, %v984
    %v986 = vpop.f32.mrf.mxu0
    %987 = vmatprep.mubr.f32.mxu0 0.0
    %988 = vmatmul.mubr.f32.gmra.mxu0 %v388
    %v989 = vpop.f32.mrf.mxu0
    %v990 = vadd.f32 %v156, %v989
    %v991 = vpop.f32.mrf.mxu0
    %992 = vmatprep.mubr.f32.mxu0 0.0
    %993 = vmatmul.mubr.f32.gmra.mxu0 %v391
    %v994 = vpop.f32.mrf.mxu0
    %v995 = vadd.f32 %v156, %v994
    %v996 = vpop.f32.mrf.mxu0
    %997 = vmatprep.mubr.f32.mxu0 0.0
    %998 = vmatmul.mubr.f32.gmra.mxu0 %v394
    %v999 = vpop.f32.mrf.mxu0
    %v1000 = vadd.f32 %v156, %v999
    %v1001 = vpop.f32.mrf.mxu0
    %1002 = vmatprep.mubr.f32.mxu0 0.0
    %1003 = vmatmul.mubr.f32.gmra.mxu0 %v397
    %v1004 = vpop.f32.mrf.mxu0
    %v1005 = vadd.f32 %v156, %v1004
    %v1006 = vpop.f32.mrf.mxu0
    %1007 = vmatprep.mubr.f32.mxu0 0.0
    %1008 = vmatmul.mubr.f32.gmra.mxu0 %v400
    %v1009 = vpop.f32.mrf.mxu0
    %v1010 = vadd.f32 %v156, %v1009
    %v1011 = vpop.f32.mrf.mxu0
    %1012 = vmatprep.mubr.f32.mxu0 0.0
    %1013 = vmatmul.mubr.f32.gmra.mxu0 %v403
    %v1014 = vpop.f32.mrf.mxu0
    %v1015 = vadd.f32 %v156, %v1014
    %v1016 = vpop.f32.mrf.mxu0
    %1017 = vmatprep.mubr.f32.mxu0 0.0
    %1018 = vmatmul.mubr.f32.gmra.mxu0 %v406
    %v1019 = vpop.f32.mrf.mxu0
    %v1020 = vadd.f32 %v156, %v1019
    %v1021 = vpop.f32.mrf.mxu0
    %1022 = vmatprep.mubr.f32.mxu0 0.0
    %1023 = vmatmul.mubr.f32.gmra.mxu0 %v409
    %v1024 = vpop.f32.mrf.mxu0
    %v1025 = vadd.f32 %v156, %v1024
    %v1026 = vpop.f32.mrf.mxu0
    %1027 = vmatprep.mubr.f32.mxu0 0.0
    %1028 = vmatmul.mubr.f32.gmra.mxu0 %v412
    %v1029 = vpop.f32.mrf.mxu0
    %v1030 = vadd.f32 %v156, %v1029
    %v1031 = vpop.f32.mrf.mxu0
    %1032 = vmatprep.mubr.f32.mxu0 0.0
    %1033 = vmatmul.mubr.f32.gmra.mxu0 %v415
    %v1034 = vpop.f32.mrf.mxu0
    %v1035 = vadd.f32 %v156, %v1034
    %v1036 = vpop.f32.mrf.mxu0
    %1037 = vmatprep.mubr.f32.mxu0 0.0
    %1038 = vmatmul.mubr.f32.gmra.mxu0 %v418
    %v1039 = vpop.f32.mrf.mxu0
    %v1040 = vadd.f32 %v156, %v1039
    %v1041 = vpop.f32.mrf.mxu0
    %1042 = vmatprep.mubr.f32.mxu0 0.0
    %1043 = vmatmul.mubr.f32.gmra.mxu0 %v421
    %v1044 = vpop.f32.mrf.mxu0
    %v1045 = vadd.f32 %v156, %v1044
    %v1046 = vpop.f32.mrf.mxu0
    %1047 = vmatprep.mubr.f32.mxu0 0.0
    %1048 = vmatmul.mubr.f32.gmra.mxu0 %v424
    %v1049 = vpop.f32.mrf.mxu0
    %v1050 = vadd.f32 %v156, %v1049
    %v1051 = vpop.f32.mrf.mxu0
    %1052 = vmatprep.mubr.f32.mxu0 0.0
    %1053 = vmatmul.mubr.f32.gmra.mxu0 %v427
    %v1054 = vpop.f32.mrf.mxu0
    %v1055 = vadd.f32 %v156, %v1054
    %v1056 = vpop.f32.mrf.mxu0
    %1057 = vmatprep.mubr.f32.mxu0 0.0
    %1058 = vmatmul.mubr.f32.gmra.mxu0 %v430
    %v1059 = vpop.f32.mrf.mxu0
    %v1060 = vadd.f32 %v156, %v1059
    %v1061 = vpop.f32.mrf.mxu0
    %1062 = vmatprep.mubr.f32.mxu0 0.0
    %1063 = vmatmul.mubr.f32.gmra.mxu0 %v433
    %v1064 = vpop.f32.mrf.mxu0
    %v1065 = vadd.f32 %v156, %v1064
    %v1066 = vpop.f32.mrf.mxu0
    %1067 = vmatprep.mubr.f32.mxu0 0.0
    %1068 = vmatmul.mubr.f32.gmra.mxu0 %v436
    %v1069 = vpop.f32.mrf.mxu0
    %v1070 = vadd.f32 %v156, %v1069
    %v1071 = vpop.f32.mrf.mxu0
    %1072 = vmatprep.mubr.f32.mxu0 0.0
    %1073 = vmatmul.mubr.f32.gmra.mxu0 %v439
    %v1074 = vpop.f32.mrf.mxu0
    %v1075 = vadd.f32 %v156, %v1074
    %v1076 = vpop.f32.mrf.mxu0
    %1077 = vmatprep.mubr.f32.mxu0 0.0
    %1078 = vmatmul.mubr.f32.gmra.mxu0 %v442
    %v1079 = vpop.f32.mrf.mxu0
    %v1080 = vadd.f32 %v156, %v1079
    %v1081 = vpop.f32.mrf.mxu0
    %1082 = vmatprep.mubr.f32.mxu0 0.0
    %1083 = vmatmul.mubr.f32.gmra.mxu0 %v445
    %v1084 = vpop.f32.mrf.mxu0
    %v1085 = vadd.f32 %v156, %v1084
    %v1086 = vpop.f32.mrf.mxu0
    %1087 = vmatprep.mubr.f32.mxu0 0.0
    %1088 = vmatmul.mubr.f32.gmra.mxu0 %v448
    %v1089 = vpop.f32.mrf.mxu0
    %v1090 = vadd.f32 %v156, %v1089
    %v1091 = vpop.f32.mrf.mxu0
    %1092 = vmatprep.mubr.f32.mxu0 0.0
    %1093 = vmatmul.mubr.f32.gmra.mxu0 %v451
    %v1094 = vpop.f32.mrf.mxu0
    %v1095 = vadd.f32 %v156, %v1094
    %v1096 = vpop.f32.mrf.mxu0
    %1097 = vmatprep.mubr.f32.mxu0 0.0
    %1098 = vmatmul.mubr.f32.gmra.mxu0 %v454
    %v1099 = vpop.f32.mrf.mxu0
    %v1100 = vadd.f32 %v156, %v1099
    %v1101 = vpop.f32.mrf.mxu0
    %1102 = vmatprep.mubr.f32.mxu0 0.0
    %1103 = vmatmul.mubr.f32.gmra.mxu0 %v457
    %v1104 = vpop.f32.mrf.mxu0
    %v1105 = vadd.f32 %v156, %v1104
    %v1106 = vpop.f32.mrf.mxu0
    %1107 = vmatprep.mubr.f32.mxu0 0.0
    %1108 = vmatmul.mubr.f32.gmra.mxu0 %v460
    %v1109 = vpop.f32.mrf.mxu0
    %v1110 = vadd.f32 %v156, %v1109
    %v1111 = vpop.f32.mrf.mxu0
    %1112 = vmatprep.mubr.f32.mxu0 0.0
    %1113 = vmatmul.mubr.f32.gmra.mxu0 %v463
    %v1114 = vpop.f32.mrf.mxu0
    %v1115 = vadd.f32 %v156, %v1114
    %v1116 = vpop.f32.mrf.mxu0
    %1117 = vmatprep.mubr.f32.mxu0 0.0
    %1118 = vmatmul.mubr.f32.gmra.mxu0 %v466
    %v1119 = vpop.f32.mrf.mxu0
    %v1120 = vadd.f32 %v156, %v1119
    %v1121 = vpop.f32.mrf.mxu0
    %1122 = vmatprep.mubr.f32.mxu0 0.0
    %1123 = vmatmul.mubr.f32.gmra.mxu0 %v469
    %v1124 = vpop.f32.mrf.mxu0
    %v1125 = vadd.f32 %v156, %v1124
    %v1126 = vpop.f32.mrf.mxu0
    %1127 = vmatprep.mubr.f32.mxu0 0.0
    %1128 = vmatmul.mubr.f32.gmra.mxu0 %v472
    %v1129 = vpop.f32.mrf.mxu0
    %v1130 = vadd.f32 %v156, %v1129
    %v1131 = vpop.f32.mrf.mxu0
    %1132 = vmatprep.mubr.f32.mxu0 0.0
    %1133 = vmatmul.mubr.f32.gmra.mxu0 %v475
    %v1134 = vpop.f32.mrf.mxu0
    %v1135 = vadd.f32 %v156, %v1134
    %v1136 = vpop.f32.mrf.mxu0
    %1137 = vmatprep.mubr.f32.mxu0 0.0
    %1138 = vmatmul.mubr.f32.gmra.mxu0 %v478
    %v1139 = vpop.f32.mrf.mxu0
    %v1140 = vadd.f32 %v156, %v1139
    %v1141 = vpop.f32.mrf.mxu0
    %1142 = vmatprep.mubr.f32.mxu0 0.0
    %1143 = vmatmul.mubr.f32.gmra.mxu0 %v481
    %v1144 = vpop.f32.mrf.mxu0
    %v1145 = vadd.f32 %v156, %v1144
    %v1146 = vpop.f32.mrf.mxu0
    %1147 = vmatprep.mubr.f32.mxu0 0.0
    %1148 = vmatmul.mubr.f32.gmra.mxu0 %v484
    %v1149 = vpop.f32.mrf.mxu0
    %v1150 = vadd.f32 %v156, %v1149
    %v1151 = vpop.f32.mrf.mxu0
    %1152 = vmatprep.mubr.f32.mxu0 0.0
    %1153 = vmatmul.mubr.f32.gmra.mxu0 %v487
    %v1154 = vpop.f32.mrf.mxu0
    %v1155 = vadd.f32 %v156, %v1154
    %v1156 = vpop.f32.mrf.mxu0
    %1157 = vmatprep.mubr.f32.mxu0 0.0
    %1158 = vmatmul.mubr.f32.gmra.mxu0 %v490
    %v1159 = vpop.f32.mrf.mxu0
    %v1160 = vadd.f32 %v156, %v1159
    %v1161 = vpop.f32.mrf.mxu0
    %1162 = vmatprep.mubr.f32.mxu0 0.0
    %1163 = vmatmul.mubr.f32.gmra.mxu0 %v493
    %v1164 = vpop.f32.mrf.mxu0
    %v1165 = vadd.f32 %v156, %v1164
    %v1166 = vpop.f32.mrf.mxu0
    %1167 = vmatprep.mubr.f32.mxu0 0.0
    %1168 = vmatmul.mubr.f32.gmra.mxu0 %v496
    %v1169 = vpop.f32.mrf.mxu0
    %v1170 = vadd.f32 %v156, %v1169
    %v1171 = vpop.f32.mrf.mxu0
    %1172 = vmatprep.mubr.f32.mxu0 0.0
    %1173 = vmatmul.mubr.f32.gmra.mxu0 %v499
    %v1174 = vpop.f32.mrf.mxu0
    %v1175 = vadd.f32 %v156, %v1174
    %v1176 = vpop.f32.mrf.mxu0
    %1177 = vmatprep.mubr.f32.mxu0 0.0
    %1178 = vmatmul.mubr.f32.gmra.mxu0 %v502
    %v1179 = vpop.f32.mrf.mxu0
    %v1180 = vadd.f32 %v156, %v1179
    %v1181 = vpop.f32.mrf.mxu0
    %1182 = vmatprep.mubr.f32.mxu0 0.0
    %1183 = vmatmul.mubr.f32.gmra.mxu0 %v505
    %v1184 = vpop.f32.mrf.mxu0
    %v1185 = vadd.f32 %v156, %v1184
    %v1186 = vpop.f32.mrf.mxu0
    %1187 = vmatprep.mubr.f32.mxu0 0.0
    %1188 = vmatmul.mubr.f32.gmra.mxu0 %v508
    %v1189 = vpop.f32.mrf.mxu0
    %v1190 = vadd.f32 %v156, %v1189
    %v1191 = vpop.f32.mrf.mxu0
    %1192 = vmatprep.mubr.f32.mxu0 0.0
    %1193 = vmatmul.mubr.f32.gmra.mxu0 %v511
    %v1194 = vpop.f32.mrf.mxu0
    %v1195 = vadd.f32 %v156, %v1194
    %v1196 = vpop.f32.mrf.mxu0
    %1197 = vmatprep.mubr.f32.mxu0 0.0
    %1198 = vmatmul.mubr.f32.gmra.mxu0 %v514
    %v1199 = vpop.f32.mrf.mxu0
    %v1200 = vadd.f32 %v156, %v1199
    %v1201 = vpop.f32.mrf.mxu0
    %1202 = vmatprep.mubr.f32.mxu0 0.0
    %1203 = vmatmul.mubr.f32.gmra.mxu0 %v517
    %v1204 = vpop.f32.mrf.mxu0
    %v1205 = vadd.f32 %v156, %v1204
    %v1206 = vpop.f32.mrf.mxu0
    %1207 = vmatprep.mubr.f32.mxu0 0.0
    %1208 = vmatmul.mubr.f32.gmra.mxu0 %v520
    %v1209 = vpop.f32.mrf.mxu0
    %v1210 = vadd.f32 %v156, %v1209
    %v1211 = vpop.f32.mrf.mxu0
    %1212 = vmatprep.mubr.f32.mxu0 0.0
    %1213 = vmatmul.mubr.f32.gmra.mxu0 %v523
    %v1214 = vpop.f32.mrf.mxu0
    %v1215 = vadd.f32 %v156, %v1214
    %v1216 = vpop.f32.mrf.mxu0
    %1217 = vmatprep.mubr.f32.mxu0 0.0
    %1218 = vmatmul.mubr.f32.gmra.mxu0 %v526
    %v1219 = vpop.f32.mrf.mxu0
    %v1220 = vadd.f32 %v156, %v1219
    %v1221 = vpop.f32.mrf.mxu0
    %1222 = vmatprep.mubr.f32.mxu0 0.0
    %1223 = vmatmul.mubr.f32.gmra.mxu0 %v529
    %v1224 = vpop.f32.mrf.mxu0
    %v1225 = vadd.f32 %v156, %v1224
    %v1226 = vpop.f32.mrf.mxu0
    %1227 = vmatprep.mubr.f32.mxu0 0.0
    %1228 = vmatmul.mubr.f32.gmra.mxu0 %v532
    %v1229 = vpop.f32.mrf.mxu0
    %v1230 = vadd.f32 %v156, %v1229
    %v1231 = vpop.f32.mrf.mxu0
    %1232 = vmatprep.mubr.f32.mxu0 0.0
    %1233 = vmatmul.mubr.f32.gmra.mxu0 %v535
    %v1234 = vpop.f32.mrf.mxu0
    %v1235 = vadd.f32 %v156, %v1234
    %v1236 = vpop.f32.mrf.mxu0
    %1237 = vmatprep.mubr.f32.mxu0 0.0
    %1238 = vmatmul.mubr.f32.gmra.mxu0 %v538
    %v1239 = vpop.f32.mrf.mxu0
    %v1240 = vadd.f32 %v156, %v1239
    %v1241 = vpop.f32.mrf.mxu0
    %1242 = vmatprep.mubr.f32.mxu0 0.0
    %1243 = vmatmul.mubr.f32.gmra.mxu0 %v541
    %v1244 = vpop.f32.mrf.mxu0
    %v1245 = vadd.f32 %v156, %v1244
    %v1246 = vpop.f32.mrf.mxu0
    %1247 = vdwg.mxu0
    %v1248 = vtanh.pop %v610
    %v1249 = vtanh.pop %v615
    %v1250 = vtanh.pop %v620
    %v1251 = vtanh.pop %v625
    %v1252 = vtanh.pop %v630
    %v1253 = vtanh.pop %v635
    %v1254 = vtanh.pop %v640
    %v1255 = vtanh.pop %v645
    %v1256 = vtanh.pop %v650
    %v1257 = vtanh.pop %v655
    %v1258 = vtanh.pop %v660
    %v1259 = vtanh.pop %v665
    %v1260 = vtanh.pop %v670
    %v1261 = vtanh.pop %v675
    %v1262 = vtanh.pop %v680
    %v1263 = vtanh.pop %v685
    %v1264 = vtanh.pop %v690
    %v1265 = vtanh.pop %v695
    %v1266 = vtanh.pop %v700
    %v1267 = vtanh.pop %v705
    %v1268 = vtanh.pop %v710
    %v1269 = vtanh.pop %v715
    %v1270 = vtanh.pop %v720
    %v1271 = vtanh.pop %v725
    %v1272 = vtanh.pop %v730
    %v1273 = vtanh.pop %v735
    %v1274 = vtanh.pop %v740
    %v1275 = vtanh.pop %v745
    %v1276 = vtanh.pop %v750
    %v1277 = vtanh.pop %v755
    %v1278 = vtanh.pop %v760
    %v1279 = vtanh.pop %v765
    %v1280 = vtanh.pop %v770
    %v1281 = vtanh.pop %v775
    %v1282 = vtanh.pop %v780
    %v1283 = vtanh.pop %v785
    %v1284 = vtanh.pop %v790
    %v1285 = vtanh.pop %v795
    %v1286 = vtanh.pop %v800
    %v1287 = vtanh.pop %v805
    %v1288 = vtanh.pop %v810
    %v1289 = vtanh.pop %v815
    %v1290 = vtanh.pop %v820
    %v1291 = vtanh.pop %v825
    %v1292 = vtanh.pop %v830
    %v1293 = vtanh.pop %v835
    %v1294 = vtanh.pop %v840
    %v1295 = vtanh.pop %v845
    %v1296 = vtanh.pop %v850
    %v1297 = vtanh.pop %v855
    %v1298 = vtanh.pop %v860
    %v1299 = vtanh.pop %v865
    %v1300 = vtanh.pop %v870
    %v1301 = vtanh.pop %v875
    %v1302 = vtanh.pop %v880
    %v1303 = vtanh.pop %v885
    %v1304 = vtanh.pop %v890
    %v1305 = vtanh.pop %v895
    %v1306 = vtanh.pop %v900
    %v1307 = vtanh.pop %v905
    %v1308 = vtanh.pop %v910
    %v1309 = vtanh.pop %v915
    %v1310 = vtanh.pop %v920
    %v1311 = vtanh.pop %v925
    %v1312 = vtanh.pop %v930
    %v1313 = vtanh.pop %v935
    %v1314 = vtanh.pop %v940
    %v1315 = vtanh.pop %v945
    %v1316 = vtanh.pop %v950
    %v1317 = vtanh.pop %v955
    %v1318 = vtanh.pop %v960
    %v1319 = vtanh.pop %v965
    %v1320 = vtanh.pop %v970
    %v1321 = vtanh.pop %v975
    %v1322 = vtanh.pop %v980
    %v1323 = vtanh.pop %v985
    %v1324 = vtanh.pop %v990
    %v1325 = vtanh.pop %v995
    %v1326 = vtanh.pop %v1000
    %v1327 = vtanh.pop %v1005
    %v1328 = vtanh.pop %v1010
    %v1329 = vtanh.pop %v1015
    %v1330 = vtanh.pop %v1020
    %v1331 = vtanh.pop %v1025
    %v1332 = vtanh.pop %v1030
    %v1333 = vtanh.pop %v1035
    %v1334 = vtanh.pop %v1040
    %v1335 = vtanh.pop %v1045
    %v1336 = vtanh.pop %v1050
    %v1337 = vtanh.pop %v1055
    %v1338 = vtanh.pop %v1060
    %v1339 = vtanh.pop %v1065
    %v1340 = vtanh.pop %v1070
    %v1341 = vtanh.pop %v1075
    %v1342 = vtanh.pop %v1080
    %v1343 = vtanh.pop %v1085
    %v1344 = vtanh.pop %v1090
    %v1345 = vtanh.pop %v1095
    %v1346 = vtanh.pop %v1100
    %v1347 = vtanh.pop %v1105
    %v1348 = vtanh.pop %v1110
    %v1349 = vtanh.pop %v1115
    %v1350 = vtanh.pop %v1120
    %v1351 = vtanh.pop %v1125
    %v1352 = vtanh.pop %v1130
    %v1353 = vtanh.pop %v1135
    %v1354 = vtanh.pop %v1140
    %v1355 = vtanh.pop %v1145
    %v1356 = vtanh.pop %v1150
    %v1357 = vtanh.pop %v1155
    %v1358 = vtanh.pop %v1160
    %v1359 = vtanh.pop %v1165
    %v1360 = vtanh.pop %v1170
    %v1361 = vtanh.pop %v1175
    %v1362 = vtanh.pop %v1180
    %v1363 = vtanh.pop %v1185
    %v1364 = vtanh.pop %v1190
    %v1365 = vtanh.pop %v1195
    %v1366 = vtanh.pop %v1200
    %v1367 = vtanh.pop %v1205
    %v1368 = vtanh.pop %v1210
    %v1369 = vtanh.pop %v1215
    %v1370 = vtanh.pop %v1220
    %v1371 = vtanh.pop %v1225
    %v1372 = vtanh.pop %v1230
    %v1373 = vtanh.pop %v1235
    %v1374 = vtanh.pop %v1240
    %v1375 = vtanh.pop %v1245
    %v1376 = vadd.f32 %v1248, %v1249
    %v1377 = vadd.f32 %v1250, %v1251
    %v1378 = vadd.f32 %v1252, %v1253
    %v1379 = vadd.f32 %v1254, %v1255
    %v1380 = vadd.f32 %v1256, %v1257
    %v1381 = vadd.f32 %v1258, %v1259
    %v1382 = vadd.f32 %v1260, %v1261
    %v1383 = vadd.f32 %v1262, %v1263
    %v1384 = vadd.f32 %v1264, %v1265
    %v1385 = vadd.f32 %v1266, %v1267
    %v1386 = vadd.f32 %v1268, %v1269
    %v1387 = vadd.f32 %v1270, %v1271
    %v1388 = vadd.f32 %v1272, %v1273
    %v1389 = vadd.f32 %v1274, %v1275
    %v1390 = vadd.f32 %v1276, %v1277
    %v1391 = vadd.f32 %v1278, %v1279
    %v1392 = vadd.f32 %v1280, %v1281
    %v1393 = vadd.f32 %v1282, %v1283
    %v1394 = vadd.f32 %v1284, %v1285
    %v1395 = vadd.f32 %v1286, %v1287
    %v1396 = vadd.f32 %v1288, %v1289
    %v1397 = vadd.f32 %v1290, %v1291
    %v1398 = vadd.f32 %v1292, %v1293
    %v1399 = vadd.f32 %v1294, %v1295
    %v1400 = vadd.f32 %v1296, %v1297
    %v1401 = vadd.f32 %v1298, %v1299
    %v1402 = vadd.f32 %v1300, %v1301
    %v1403 = vadd.f32 %v1302, %v1303
    %v1404 = vadd.f32 %v1304, %v1305
    %v1405 = vadd.f32 %v1306, %v1307
    %v1406 = vadd.f32 %v1308, %v1309
    %v1407 = vadd.f32 %v1310, %v1311
    %v1408 = vadd.f32 %v1312, %v1313
    %v1409 = vadd.f32 %v1314, %v1315
    %v1410 = vadd.f32 %v1316, %v1317
    %v1411 = vadd.f32 %v1318, %v1319
    %v1412 = vadd.f32 %v1320, %v1321
    %v1413 = vadd.f32 %v1322, %v1323
    %v1414 = vadd.f32 %v1324, %v1325
    %v1415 = vadd.f32 %v1326, %v1327
    %v1416 = vadd.f32 %v1328, %v1329
    %v1417 = vadd.f32 %v1330, %v1331
    %v1418 = vadd.f32 %v1332, %v1333
    %v1419 = vadd.f32 %v1334, %v1335
    %v1420 = vadd.f32 %v1336, %v1337
    %v1421 = vadd.f32 %v1338, %v1339
    %v1422 = vadd.f32 %v1340, %v1341
    %v1423 = vadd.f32 %v1342, %v1343
    %v1424 = vadd.f32 %v1344, %v1345
    %v1425 = vadd.f32 %v1346, %v1347
    %v1426 = vadd.f32 %v1348, %v1349
    %v1427 = vadd.f32 %v1350, %v1351
    %v1428 = vadd.f32 %v1352, %v1353
    %v1429 = vadd.f32 %v1354, %v1355
    %v1430 = vadd.f32 %v1356, %v1357
    %v1431 = vadd.f32 %v1358, %v1359
    %v1432 = vadd.f32 %v1360, %v1361
    %v1433 = vadd.f32 %v1362, %v1363
    %v1434 = vadd.f32 %v1364, %v1365
    %v1435 = vadd.f32 %v1366, %v1367
    %v1436 = vadd.f32 %v1368, %v1369
    %v1437 = vadd.f32 %v1370, %v1371
    %v1438 = vadd.f32 %v1372, %v1373
    %v1439 = vadd.f32 %v1374, %v1375
    %v1440 = vadd.f32 %v1376, %v1377
    %v1441 = vadd.f32 %v1378, %v1379
    %v1442 = vadd.f32 %v1380, %v1381
    %v1443 = vadd.f32 %v1382, %v1383
    %v1444 = vadd.f32 %v1384, %v1385
    %v1445 = vadd.f32 %v1386, %v1387
    %v1446 = vadd.f32 %v1388, %v1389
    %v1447 = vadd.f32 %v1390, %v1391
    %v1448 = vadd.f32 %v1392, %v1393
    %v1449 = vadd.f32 %v1394, %v1395
    %v1450 = vadd.f32 %v1396, %v1397
    %v1451 = vadd.f32 %v1398, %v1399
    %v1452 = vadd.f32 %v1400, %v1401
    %v1453 = vadd.f32 %v1402, %v1403
    %v1454 = vadd.f32 %v1404, %v1405
    %v1455 = vadd.f32 %v1406, %v1407
    %v1456 = vadd.f32 %v1408, %v1409
    %v1457 = vadd.f32 %v1410, %v1411
    %v1458 = vadd.f32 %v1412, %v1413
    %v1459 = vadd.f32 %v1414, %v1415
    %v1460 = vadd.f32 %v1416, %v1417
    %v1461 = vadd.f32 %v1418, %v1419
    %v1462 = vadd.f32 %v1420, %v1421
    %v1463 = vadd.f32 %v1422, %v1423
    %v1464 = vadd.f32 %v1424, %v1425
    %v1465 = vadd.f32 %v1426, %v1427
    %v1466 = vadd.f32 %v1428, %v1429
    %v1467 = vadd.f32 %v1430, %v1431
    %v1468 = vadd.f32 %v1432, %v1433
    %v1469 = vadd.f32 %v1434, %v1435
    %v1470 = vadd.f32 %v1436, %v1437
    %v1471 = vadd.f32 %v1438, %v1439
    %v1472 = vadd.f32 %v1440, %v1441
    %v1473 = vadd.f32 %v1442, %v1443
    %v1474 = vadd.f32 %v1444, %v1445
    %v1475 = vadd.f32 %v1446, %v1447
    %v1476 = vadd.f32 %v1448, %v1449
    %v1477 = vadd.f32 %v1450, %v1451
    %v1478 = vadd.f32 %v1452, %v1453
    %v1479 = vadd.f32 %v1454, %v1455
    %v1480 = vadd.f32 %v1456, %v1457
    %v1481 = vadd.f32 %v1458, %v1459
    %v1482 = vadd.f32 %v1460, %v1461
    %v1483 = vadd.f32 %v1462, %v1463
    %v1484 = vadd.f32 %v1464, %v1465
    %v1485 = vadd.f32 %v1466, %v1467
    %v1486 = vadd.f32 %v1468, %v1469
    %v1487 = vadd.f32 %v1470, %v1471
    %v1488 = vadd.f32 %v1472, %v1473
    %v1489 = vadd.f32 %v1474, %v1475
    %v1490 = vadd.f32 %v1476, %v1477
    %v1491 = vadd.f32 %v1478, %v1479
    %v1492 = vadd.f32 %v1480, %v1481
    %v1493 = vadd.f32 %v1482, %v1483
    %v1494 = vadd.f32 %v1484, %v1485
    %v1495 = vadd.f32 %v1486, %v1487
    %v1496 = vadd.f32 %v1488, %v1489
    %v1497 = vadd.f32 %v1490, %v1491
    %v1498 = vadd.f32 %v1492, %v1493
    %v1499 = vadd.f32 %v1494, %v1495
    %v1500 = vadd.f32 %v1496, %v1497
    %v1501 = vadd.f32 %v1498, %v1499
    %v1502 = vadd.f32 %v1500, %v1501
    %v1503 = vadd.f32 %v1502, 0.0
    %1504 = vst [vmem:[#allocation2] sm:$0xff] %v1503
    // Predicated region
    $region14: #{tpu_custom_call.1} parent=1 // pred_check
      _
    $region15: #{tpu_custom_call.1} parent=1 // pred_check_branch
      %1506 = sbr.rel (0) target = $region17
    $region16: #{tpu_custom_call.1} parent=1 // pred_region
      %s1508 = ssub.s32 128, 128
      %1509 = vsyncadd [#allocation3], %s1508
      %s1511 = sshll.u32 [#allocation2], 4
      %s1512 = int_to_ptr.vmem [resolvable:$true] %s1511
      %1514 = dma.vmem_to_hbm [thread:$0]  %s1512, 128, %s3, [#allocation3]
    $region17: #{tpu_custom_call.1} parent=1 // pred_fallthru
      _
    // Predicated region
    $region18: #{tpu_custom_call.1} parent=1 // pred_check
      _
    $region19: #{tpu_custom_call.1} parent=1 // pred_check_branch
      %1516 = sbr.rel (0) target = $region21
    $region20: #{tpu_custom_call.1} parent=1 // pred_region
      %1517 = dma.done [#allocation3], 128
    $region21: #{tpu_custom_call.1} parent=1 // pred_fallthru
      _
    %1518 = vsyncpa [#allocation3], 1

</llo_original>
